<compile_context>
chip_gen: v7x
topology: tpu7x:2x2x1
jax: 0.10.0
libtpu: 0.0.40
codegen_flags: <defaults>
</compile_context>

<pallas_src>
import functools

import jax
import jax.numpy as jnp
from jax.experimental import pallas as pl
from jax.experimental.pallas import tpu as pltpu


def _encoder_lstm_kernel(x_ref, wih_ref, whh_ref, b_ref, h_out_ref, c_out_ref,
                         *, seq_len, batch, hidden_size, input_size):
    """Whole LSTM forward in a single kernel invocation (no grid).

    x_ref   : (T*B, I)  time-major flattened inputs (row t*B + b == x[b, t, :])
    wih_ref : (I, 4H)   W_ih^T
    whh_ref : (H, 4H)   W_hh^T
    b_ref   : (1, 4H)   b_ih + b_hh
    h_out_ref, c_out_ref : (B, H) final hidden / cell state.
    """
    T, B, H, I = seq_len, batch, hidden_size, input_size

    # Loop-invariant operands: load once, live across the whole recurrence.
    wih = wih_ref[...]                         # (I, 4H)
    whh = whh_ref[...]                         # (H, 4H)
    b = b_ref[...]                             # (1, 4H)

    h = jnp.zeros((B, H), jnp.float32)
    c = jnp.zeros((B, H), jnp.float32)

    # Fully unrolled serial recurrence: T is small & static here.
    for t in range(T):
        x_t = x_ref[pl.ds(t * B, B), :]        # (B, I), static VMEM load

        # Input projection folded into the kernel.  With I == 1 it is a pure
        # VPU broadcast multiply-add (no GEMM, no HBM xw round trip); it does
        # not depend on the (h, c) carry, so it overlaps the recurrent matmul.
        if I == 1:
            xw_t = x_t * wih + b               # (B, 4H)
        else:
            xw_t = jnp.dot(x_t, wih, preferred_element_type=jnp.float32) + b

        # Recurrent projection on the MXU (the serial critical path).
        gates = xw_t + jnp.dot(h, whh, preferred_element_type=jnp.float32)

        # PyTorch gate order (i, f, g, o).  With H a multiple of 128 each gate
        # slice is a whole-vreg, lane-aligned chunk -> no lane shuffles.
        i_g = jax.nn.sigmoid(gates[:, 0 * H:1 * H])
        f_g = jax.nn.sigmoid(gates[:, 1 * H:2 * H])
        g_g = jnp.tanh(gates[:, 2 * H:3 * H])
        o_g = jax.nn.sigmoid(gates[:, 3 * H:4 * H])

        c = f_g * c + i_g * g_g
        h = o_g * jnp.tanh(c)

    h_out_ref[...] = h.astype(h_out_ref.dtype)
    c_out_ref[...] = c.astype(c_out_ref.dtype)


def prepare_encoder_params(weight_ih, weight_hh, bias_ih, bias_hh):
    """One-time parameter prep: PyTorch layout -> kernel layout (f32)."""
    wih_t = jnp.transpose(weight_ih, (1, 0)).astype(jnp.float32)      # (I, 4H)
    whh_t = jnp.transpose(weight_hh, (1, 0)).astype(jnp.float32)      # (H, 4H)
    b = (bias_ih + bias_hh).astype(jnp.float32).reshape(1, -1)        # (1, 4H)
    return wih_t, whh_t, b


@jax.jit
def encoder_forward(x, params):
    """x: (B, T, I) float32 (batch_first, like nn.LSTM).

    Returns (hidden, cell), each of shape (1, B, H), matching nn.LSTM.
    """
    wih_t, whh_t, b = params
    B, T, I = x.shape
    H = whh_t.shape[0]

    # Only wrapper-side data movement: a tiny time-major flatten of the raw
    # input (T*B*I*4 bytes).  No GEMM, no (T, B, 4H) xw buffer in HBM.
    x_tm = jnp.transpose(x, (1, 0, 2)).reshape(T * B, I).astype(jnp.float32)

    kernel = functools.partial(_encoder_lstm_kernel, seq_len=T, batch=B,
                               hidden_size=H, input_size=I)

    h_out, c_out = pl.pallas_call(
        kernel,
        out_shape=(
            jax.ShapeDtypeStruct((B, H), jnp.float32),
            jax.ShapeDtypeStruct((B, H), jnp.float32),
        ),
        # No grid: one invocation, whole arrays resident in VMEM (~0.3 MiB).
        in_specs=[pl.BlockSpec(memory_space=pltpu.MemorySpace.VMEM)] * 4,
        out_specs=(
            pl.BlockSpec(memory_space=pltpu.MemorySpace.VMEM),
            pl.BlockSpec(memory_space=pltpu.MemorySpace.VMEM),
        ),
    )(x_tm, wih_t, whh_t, b)

    # nn.LSTM returns hidden/cell with a leading (num_layers*num_dirs)=1 axis.
    return h_out[None, :, :], c_out[None, :, :]


def _lstm_reference(x, weight_ih, weight_hh, bias_ih, bias_hh):
    """Pure-JAX reference (same math as torch.nn.LSTM, gate order i,f,g,o)."""
    B, T, I = x.shape
    H = weight_hh.shape[1]
    b = bias_ih + bias_hh

    def step(carry, x_t):
        h, c = carry
        gates = x_t @ weight_ih.T + h @ weight_hh.T + b
        i = jax.nn.sigmoid(gates[:, 0 * H:1 * H])
        f = jax.nn.sigmoid(gates[:, 1 * H:2 * H])
        g = jnp.tanh(gates[:, 2 * H:3 * H])
        o = jax.nn.sigmoid(gates[:, 3 * H:4 * H])
        c_new = f * c + i * g
        h_new = o * jnp.tanh(c_new)
        return (h_new, c_new), None

    h0 = jnp.zeros((B, H), jnp.float32)
    c0 = jnp.zeros((B, H), jnp.float32)
    (h, c), _ = jax.lax.scan(step, (h0, c0), jnp.transpose(x, (1, 0, 2)))
    return h[None], c[None]


if __name__ == "__main__":
    # Shapes per the module spec: input_size=1, hidden_size=128; small
    # batch=2, seq=8 example.
    B, T, I, H = 2, 8, 1, 128

    key = jax.random.PRNGKey(0)
    k_x, k_wih, k_whh, k_bih, k_bhh = jax.random.split(key, 5)

    # Deterministic PyTorch-style init: uniform(-1/sqrt(H), 1/sqrt(H)).
    bound = 1.0 / (H ** 0.5)
    weight_ih = jax.random.uniform(k_wih, (4 * H, I), jnp.float32, -bound, bound)
    weight_hh = jax.random.uniform(k_whh, (4 * H, H), jnp.float32, -bound, bound)
    bias_ih = jax.random.uniform(k_bih, (4 * H,), jnp.float32, -bound, bound)
    bias_hh = jax.random.uniform(k_bhh, (4 * H,), jnp.float32, -bound, bound)

    x = jax.random.normal(k_x, (B, T, I), jnp.float32)

    params = prepare_encoder_params(weight_ih, weight_hh, bias_ih, bias_hh)
    hidden, cell = encoder_forward(x, params)
    jax.block_until_ready((hidden, cell))

    h_ref, c_ref = _lstm_reference(x, weight_ih, weight_hh, bias_ih, bias_hh)
    assert hidden.shape == (1, B, H) and cell.shape == (1, B, H)
    # Tolerance slightly relaxed vs 1e-5 purely to absorb MXU f32-emulation
    # differences between the kernel matmul and the XLA reference matmul.
    assert jnp.allclose(hidden, h_ref, atol=1e-4, rtol=1e-4)
    assert jnp.allclose(cell, c_ref, atol=1e-4, rtol=1e-4)

    print("KERNEL_OK")
</pallas_src>

<mosaic_0001>
module attributes {stable_mosaic.version = 11 : i64} {
  func.func @_encoder_lstm_kernel(%arg0: memref<16x1xf32, #tpu.memory_space<vmem>>, %arg1: memref<1x512xf32, #tpu.memory_space<vmem>>, %arg2: memref<128x512xf32, #tpu.memory_space<vmem>>, %arg3: memref<1x512xf32, #tpu.memory_space<vmem>>, %arg4: memref<2x128xf32, #tpu.memory_space<vmem>>, %arg5: memref<2x128xf32, #tpu.memory_space<vmem>>) attributes {dimension_semantics = [], scalar_prefetch = 0 : i64, scratch_operands = 0 : i64, tpu.core_type = #tpu.core_type<tc>} {
    %c0 = arith.constant 0 : index
    %c0_0 = arith.constant 0 : index
    %0 = vector.load %arg1[%c0, %c0_0] : memref<1x512xf32, #tpu.memory_space<vmem>>, vector<1x512xf32>
    %c0_1 = arith.constant 0 : index
    %c0_2 = arith.constant 0 : index
    %1 = vector.load %arg2[%c0_1, %c0_2] : memref<128x512xf32, #tpu.memory_space<vmem>>, vector<128x512xf32>
    %c0_3 = arith.constant 0 : index
    %c0_4 = arith.constant 0 : index
    %2 = vector.load %arg3[%c0_3, %c0_4] : memref<1x512xf32, #tpu.memory_space<vmem>>, vector<1x512xf32>
    %cst = arith.constant 0.000000e+00 : f32
    %3 = vector.broadcast %cst : f32 to vector<2x128xf32>
    %cst_5 = arith.constant 0.000000e+00 : f32
    %4 = vector.broadcast %cst_5 : f32 to vector<2x128xf32>
    %c0_6 = arith.constant 0 : index
    %c0_7 = arith.constant 0 : index
    %5 = vector.load %arg0[%c0_6, %c0_7] : memref<16x1xf32, #tpu.memory_space<vmem>>, vector<2x1xf32>
    %6 = vector.broadcast %5 : vector<2x1xf32> to vector<2x512xf32>
    %7 = vector.broadcast %0 : vector<1x512xf32> to vector<2x512xf32>
    %8 = arith.mulf %6, %7 : vector<2x512xf32>
    %9 = vector.broadcast %2 : vector<1x512xf32> to vector<2x512xf32>
    %10 = arith.addf %8, %9 : vector<2x512xf32>
    %cst_8 = arith.constant dense<0.000000e+00> : vector<2x512xf32>
    %11 = tpu.matmul %3, %1, %cst_8 {dimension_numbers = #tpu.dot_dimension_numbers<[1], [0], [0], [1], [0, 0, 1, 1], [], []>} : vector<2x128xf32>, vector<128x512xf32>, vector<2x512xf32> -> vector<2x512xf32>
    %12 = arith.addf %10, %11 : vector<2x512xf32>
    %13 = vector.extract_strided_slice %12 {offsets = [0, 0], sizes = [2, 128], strides = [1, 1]} : vector<2x512xf32> to vector<2x128xf32>
    %14 = arith.negf %13 : vector<2x128xf32>
    %15 = math.exp %14 : vector<2x128xf32>
    %cst_9 = arith.constant 1.000000e+00 : f32
    %16 = vector.broadcast %cst_9 : f32 to vector<2x128xf32>
    %17 = arith.addf %16, %15 : vector<2x128xf32>
    %18 = arith.divf %16, %17 : vector<2x128xf32>
    %19 = vector.extract_strided_slice %12 {offsets = [0, 128], sizes = [2, 128], strides = [1, 1]} : vector<2x512xf32> to vector<2x128xf32>
    %20 = arith.negf %19 : vector<2x128xf32>
    %21 = math.exp %20 : vector<2x128xf32>
    %cst_10 = arith.constant 1.000000e+00 : f32
    %22 = vector.broadcast %cst_10 : f32 to vector<2x128xf32>
    %23 = arith.addf %22, %21 : vector<2x128xf32>
    %24 = arith.divf %22, %23 : vector<2x128xf32>
    %25 = vector.extract_strided_slice %12 {offsets = [0, 256], sizes = [2, 128], strides = [1, 1]} : vector<2x512xf32> to vector<2x128xf32>
    %26 = math.tanh %25 : vector<2x128xf32>
    %27 = vector.extract_strided_slice %12 {offsets = [0, 384], sizes = [2, 128], strides = [1, 1]} : vector<2x512xf32> to vector<2x128xf32>
    %28 = arith.negf %27 : vector<2x128xf32>
    %29 = math.exp %28 : vector<2x128xf32>
    %cst_11 = arith.constant 1.000000e+00 : f32
    %30 = vector.broadcast %cst_11 : f32 to vector<2x128xf32>
    %31 = arith.addf %30, %29 : vector<2x128xf32>
    %32 = arith.divf %30, %31 : vector<2x128xf32>
    %33 = arith.mulf %24, %4 : vector<2x128xf32>
    %34 = arith.mulf %18, %26 : vector<2x128xf32>
    %35 = arith.addf %33, %34 : vector<2x128xf32>
    %36 = math.tanh %35 : vector<2x128xf32>
    %37 = arith.mulf %32, %36 : vector<2x128xf32>
    %c2 = arith.constant 2 : index
    %c0_12 = arith.constant 0 : index
    %38 = vector.load %arg0[%c2, %c0_12] : memref<16x1xf32, #tpu.memory_space<vmem>>, vector<2x1xf32>
    %39 = vector.broadcast %38 : vector<2x1xf32> to vector<2x512xf32>
    %40 = vector.broadcast %0 : vector<1x512xf32> to vector<2x512xf32>
    %41 = arith.mulf %39, %40 : vector<2x512xf32>
    %42 = vector.broadcast %2 : vector<1x512xf32> to vector<2x512xf32>
    %43 = arith.addf %41, %42 : vector<2x512xf32>
    %cst_13 = arith.constant dense<0.000000e+00> : vector<2x512xf32>
    %44 = tpu.matmul %37, %1, %cst_13 {dimension_numbers = #tpu.dot_dimension_numbers<[1], [0], [0], [1], [0, 0, 1, 1], [], []>} : vector<2x128xf32>, vector<128x512xf32>, vector<2x512xf32> -> vector<2x512xf32>
    %45 = arith.addf %43, %44 : vector<2x512xf32>
    %46 = vector.extract_strided_slice %45 {offsets = [0, 0], sizes = [2, 128], strides = [1, 1]} : vector<2x512xf32> to vector<2x128xf32>
    %47 = arith.negf %46 : vector<2x128xf32>
    %48 = math.exp %47 : vector<2x128xf32>
    %cst_14 = arith.constant 1.000000e+00 : f32
    %49 = vector.broadcast %cst_14 : f32 to vector<2x128xf32>
    %50 = arith.addf %49, %48 : vector<2x128xf32>
    %51 = arith.divf %49, %50 : vector<2x128xf32>
    %52 = vector.extract_strided_slice %45 {offsets = [0, 128], sizes = [2, 128], strides = [1, 1]} : vector<2x512xf32> to vector<2x128xf32>
    %53 = arith.negf %52 : vector<2x128xf32>
    %54 = math.exp %53 : vector<2x128xf32>
    %cst_15 = arith.constant 1.000000e+00 : f32
    %55 = vector.broadcast %cst_15 : f32 to vector<2x128xf32>
    %56 = arith.addf %55, %54 : vector<2x128xf32>
    %57 = arith.divf %55, %56 : vector<2x128xf32>
    %58 = vector.extract_strided_slice %45 {offsets = [0, 256], sizes = [2, 128], strides = [1, 1]} : vector<2x512xf32> to vector<2x128xf32>
    %59 = math.tanh %58 : vector<2x128xf32>
    %60 = vector.extract_strided_slice %45 {offsets = [0, 384], sizes = [2, 128], strides = [1, 1]} : vector<2x512xf32> to vector<2x128xf32>
    %61 = arith.negf %60 : vector<2x128xf32>
    %62 = math.exp %61 : vector<2x128xf32>
    %cst_16 = arith.constant 1.000000e+00 : f32
    %63 = vector.broadcast %cst_16 : f32 to vector<2x128xf32>
    %64 = arith.addf %63, %62 : vector<2x128xf32>
    %65 = arith.divf %63, %64 : vector<2x128xf32>
    %66 = arith.mulf %57, %35 : vector<2x128xf32>
    %67 = arith.mulf %51, %59 : vector<2x128xf32>
    %68 = arith.addf %66, %67 : vector<2x128xf32>
    %69 = math.tanh %68 : vector<2x128xf32>
    %70 = arith.mulf %65, %69 : vector<2x128xf32>
    %c4 = arith.constant 4 : index
    %c0_17 = arith.constant 0 : index
    %71 = vector.load %arg0[%c4, %c0_17] : memref<16x1xf32, #tpu.memory_space<vmem>>, vector<2x1xf32>
    %72 = vector.broadcast %71 : vector<2x1xf32> to vector<2x512xf32>
    %73 = vector.broadcast %0 : vector<1x512xf32> to vector<2x512xf32>
    %74 = arith.mulf %72, %73 : vector<2x512xf32>
    %75 = vector.broadcast %2 : vector<1x512xf32> to vector<2x512xf32>
    %76 = arith.addf %74, %75 : vector<2x512xf32>
    %cst_18 = arith.constant dense<0.000000e+00> : vector<2x512xf32>
    %77 = tpu.matmul %70, %1, %cst_18 {dimension_numbers = #tpu.dot_dimension_numbers<[1], [0], [0], [1], [0, 0, 1, 1], [], []>} : vector<2x128xf32>, vector<128x512xf32>, vector<2x512xf32> -> vector<2x512xf32>
    %78 = arith.addf %76, %77 : vector<2x512xf32>
    %79 = vector.extract_strided_slice %78 {offsets = [0, 0], sizes = [2, 128], strides = [1, 1]} : vector<2x512xf32> to vector<2x128xf32>
    %80 = arith.negf %79 : vector<2x128xf32>
    %81 = math.exp %80 : vector<2x128xf32>
    %cst_19 = arith.constant 1.000000e+00 : f32
    %82 = vector.broadcast %cst_19 : f32 to vector<2x128xf32>
    %83 = arith.addf %82, %81 : vector<2x128xf32>
    %84 = arith.divf %82, %83 : vector<2x128xf32>
    %85 = vector.extract_strided_slice %78 {offsets = [0, 128], sizes = [2, 128], strides = [1, 1]} : vector<2x512xf32> to vector<2x128xf32>
    %86 = arith.negf %85 : vector<2x128xf32>
    %87 = math.exp %86 : vector<2x128xf32>
    %cst_20 = arith.constant 1.000000e+00 : f32
    %88 = vector.broadcast %cst_20 : f32 to vector<2x128xf32>
    %89 = arith.addf %88, %87 : vector<2x128xf32>
    %90 = arith.divf %88, %89 : vector<2x128xf32>
    %91 = vector.extract_strided_slice %78 {offsets = [0, 256], sizes = [2, 128], strides = [1, 1]} : vector<2x512xf32> to vector<2x128xf32>
    %92 = math.tanh %91 : vector<2x128xf32>
    %93 = vector.extract_strided_slice %78 {offsets = [0, 384], sizes = [2, 128], strides = [1, 1]} : vector<2x512xf32> to vector<2x128xf32>
    %94 = arith.negf %93 : vector<2x128xf32>
    %95 = math.exp %94 : vector<2x128xf32>
    %cst_21 = arith.constant 1.000000e+00 : f32
    %96 = vector.broadcast %cst_21 : f32 to vector<2x128xf32>
    %97 = arith.addf %96, %95 : vector<2x128xf32>
    %98 = arith.divf %96, %97 : vector<2x128xf32>
    %99 = arith.mulf %90, %68 : vector<2x128xf32>
    %100 = arith.mulf %84, %92 : vector<2x128xf32>
    %101 = arith.addf %99, %100 : vector<2x128xf32>
    %102 = math.tanh %101 : vector<2x128xf32>
    %103 = arith.mulf %98, %102 : vector<2x128xf32>
    %c6 = arith.constant 6 : index
    %c0_22 = arith.constant 0 : index
    %104 = vector.load %arg0[%c6, %c0_22] : memref<16x1xf32, #tpu.memory_space<vmem>>, vector<2x1xf32>
    %105 = vector.broadcast %104 : vector<2x1xf32> to vector<2x512xf32>
    %106 = vector.broadcast %0 : vector<1x512xf32> to vector<2x512xf32>
    %107 = arith.mulf %105, %106 : vector<2x512xf32>
    %108 = vector.broadcast %2 : vector<1x512xf32> to vector<2x512xf32>
    %109 = arith.addf %107, %108 : vector<2x512xf32>
    %cst_23 = arith.constant dense<0.000000e+00> : vector<2x512xf32>
    %110 = tpu.matmul %103, %1, %cst_23 {dimension_numbers = #tpu.dot_dimension_numbers<[1], [0], [0], [1], [0, 0, 1, 1], [], []>} : vector<2x128xf32>, vector<128x512xf32>, vector<2x512xf32> -> vector<2x512xf32>
    %111 = arith.addf %109, %110 : vector<2x512xf32>
    %112 = vector.extract_strided_slice %111 {offsets = [0, 0], sizes = [2, 128], strides = [1, 1]} : vector<2x512xf32> to vector<2x128xf32>
    %113 = arith.negf %112 : vector<2x128xf32>
    %114 = math.exp %113 : vector<2x128xf32>
    %cst_24 = arith.constant 1.000000e+00 : f32
    %115 = vector.broadcast %cst_24 : f32 to vector<2x128xf32>
    %116 = arith.addf %115, %114 : vector<2x128xf32>
    %117 = arith.divf %115, %116 : vector<2x128xf32>
    %118 = vector.extract_strided_slice %111 {offsets = [0, 128], sizes = [2, 128], strides = [1, 1]} : vector<2x512xf32> to vector<2x128xf32>
    %119 = arith.negf %118 : vector<2x128xf32>
    %120 = math.exp %119 : vector<2x128xf32>
    %cst_25 = arith.constant 1.000000e+00 : f32
    %121 = vector.broadcast %cst_25 : f32 to vector<2x128xf32>
    %122 = arith.addf %121, %120 : vector<2x128xf32>
    %123 = arith.divf %121, %122 : vector<2x128xf32>
    %124 = vector.extract_strided_slice %111 {offsets = [0, 256], sizes = [2, 128], strides = [1, 1]} : vector<2x512xf32> to vector<2x128xf32>
    %125 = math.tanh %124 : vector<2x128xf32>
    %126 = vector.extract_strided_slice %111 {offsets = [0, 384], sizes = [2, 128], strides = [1, 1]} : vector<2x512xf32> to vector<2x128xf32>
    %127 = arith.negf %126 : vector<2x128xf32>
    %128 = math.exp %127 : vector<2x128xf32>
    %cst_26 = arith.constant 1.000000e+00 : f32
    %129 = vector.broadcast %cst_26 : f32 to vector<2x128xf32>
    %130 = arith.addf %129, %128 : vector<2x128xf32>
    %131 = arith.divf %129, %130 : vector<2x128xf32>
    %132 = arith.mulf %123, %101 : vector<2x128xf32>
    %133 = arith.mulf %117, %125 : vector<2x128xf32>
    %134 = arith.addf %132, %133 : vector<2x128xf32>
    %135 = math.tanh %134 : vector<2x128xf32>
    %136 = arith.mulf %131, %135 : vector<2x128xf32>
    %c8 = arith.constant 8 : index
    %c0_27 = arith.constant 0 : index
    %137 = vector.load %arg0[%c8, %c0_27] : memref<16x1xf32, #tpu.memory_space<vmem>>, vector<2x1xf32>
    %138 = vector.broadcast %137 : vector<2x1xf32> to vector<2x512xf32>
    %139 = vector.broadcast %0 : vector<1x512xf32> to vector<2x512xf32>
    %140 = arith.mulf %138, %139 : vector<2x512xf32>
    %141 = vector.broadcast %2 : vector<1x512xf32> to vector<2x512xf32>
    %142 = arith.addf %140, %141 : vector<2x512xf32>
    %cst_28 = arith.constant dense<0.000000e+00> : vector<2x512xf32>
    %143 = tpu.matmul %136, %1, %cst_28 {dimension_numbers = #tpu.dot_dimension_numbers<[1], [0], [0], [1], [0, 0, 1, 1], [], []>} : vector<2x128xf32>, vector<128x512xf32>, vector<2x512xf32> -> vector<2x512xf32>
    %144 = arith.addf %142, %143 : vector<2x512xf32>
    %145 = vector.extract_strided_slice %144 {offsets = [0, 0], sizes = [2, 128], strides = [1, 1]} : vector<2x512xf32> to vector<2x128xf32>
    %146 = arith.negf %145 : vector<2x128xf32>
    %147 = math.exp %146 : vector<2x128xf32>
    %cst_29 = arith.constant 1.000000e+00 : f32
    %148 = vector.broadcast %cst_29 : f32 to vector<2x128xf32>
    %149 = arith.addf %148, %147 : vector<2x128xf32>
    %150 = arith.divf %148, %149 : vector<2x128xf32>
    %151 = vector.extract_strided_slice %144 {offsets = [0, 128], sizes = [2, 128], strides = [1, 1]} : vector<2x512xf32> to vector<2x128xf32>
    %152 = arith.negf %151 : vector<2x128xf32>
    %153 = math.exp %152 : vector<2x128xf32>
    %cst_30 = arith.constant 1.000000e+00 : f32
    %154 = vector.broadcast %cst_30 : f32 to vector<2x128xf32>
    %155 = arith.addf %154, %153 : vector<2x128xf32>
    %156 = arith.divf %154, %155 : vector<2x128xf32>
    %157 = vector.extract_strided_slice %144 {offsets = [0, 256], sizes = [2, 128], strides = [1, 1]} : vector<2x512xf32> to vector<2x128xf32>
    %158 = math.tanh %157 : vector<2x128xf32>
    %159 = vector.extract_strided_slice %144 {offsets = [0, 384], sizes = [2, 128], strides = [1, 1]} : vector<2x512xf32> to vector<2x128xf32>
    %160 = arith.negf %159 : vector<2x128xf32>
    %161 = math.exp %160 : vector<2x128xf32>
    %cst_31 = arith.constant 1.000000e+00 : f32
    %162 = vector.broadcast %cst_31 : f32 to vector<2x128xf32>
    %163 = arith.addf %162, %161 : vector<2x128xf32>
    %164 = arith.divf %162, %163 : vector<2x128xf32>
    %165 = arith.mulf %156, %134 : vector<2x128xf32>
    %166 = arith.mulf %150, %158 : vector<2x128xf32>
    %167 = arith.addf %165, %166 : vector<2x128xf32>
    %168 = math.tanh %167 : vector<2x128xf32>
    %169 = arith.mulf %164, %168 : vector<2x128xf32>
    %c10 = arith.constant 10 : index
    %c0_32 = arith.constant 0 : index
    %170 = vector.load %arg0[%c10, %c0_32] : memref<16x1xf32, #tpu.memory_space<vmem>>, vector<2x1xf32>
    %171 = vector.broadcast %170 : vector<2x1xf32> to vector<2x512xf32>
    %172 = vector.broadcast %0 : vector<1x512xf32> to vector<2x512xf32>
    %173 = arith.mulf %171, %172 : vector<2x512xf32>
    %174 = vector.broadcast %2 : vector<1x512xf32> to vector<2x512xf32>
    %175 = arith.addf %173, %174 : vector<2x512xf32>
    %cst_33 = arith.constant dense<0.000000e+00> : vector<2x512xf32>
    %176 = tpu.matmul %169, %1, %cst_33 {dimension_numbers = #tpu.dot_dimension_numbers<[1], [0], [0], [1], [0, 0, 1, 1], [], []>} : vector<2x128xf32>, vector<128x512xf32>, vector<2x512xf32> -> vector<2x512xf32>
    %177 = arith.addf %175, %176 : vector<2x512xf32>
    %178 = vector.extract_strided_slice %177 {offsets = [0, 0], sizes = [2, 128], strides = [1, 1]} : vector<2x512xf32> to vector<2x128xf32>
    %179 = arith.negf %178 : vector<2x128xf32>
    %180 = math.exp %179 : vector<2x128xf32>
    %cst_34 = arith.constant 1.000000e+00 : f32
    %181 = vector.broadcast %cst_34 : f32 to vector<2x128xf32>
    %182 = arith.addf %181, %180 : vector<2x128xf32>
    %183 = arith.divf %181, %182 : vector<2x128xf32>
    %184 = vector.extract_strided_slice %177 {offsets = [0, 128], sizes = [2, 128], strides = [1, 1]} : vector<2x512xf32> to vector<2x128xf32>
    %185 = arith.negf %184 : vector<2x128xf32>
    %186 = math.exp %185 : vector<2x128xf32>
    %cst_35 = arith.constant 1.000000e+00 : f32
    %187 = vector.broadcast %cst_35 : f32 to vector<2x128xf32>
    %188 = arith.addf %187, %186 : vector<2x128xf32>
    %189 = arith.divf %187, %188 : vector<2x128xf32>
    %190 = vector.extract_strided_slice %177 {offsets = [0, 256], sizes = [2, 128], strides = [1, 1]} : vector<2x512xf32> to vector<2x128xf32>
    %191 = math.tanh %190 : vector<2x128xf32>
    %192 = vector.extract_strided_slice %177 {offsets = [0, 384], sizes = [2, 128], strides = [1, 1]} : vector<2x512xf32> to vector<2x128xf32>
    %193 = arith.negf %192 : vector<2x128xf32>
    %194 = math.exp %193 : vector<2x128xf32>
    %cst_36 = arith.constant 1.000000e+00 : f32
    %195 = vector.broadcast %cst_36 : f32 to vector<2x128xf32>
    %196 = arith.addf %195, %194 : vector<2x128xf32>
    %197 = arith.divf %195, %196 : vector<2x128xf32>
    %198 = arith.mulf %189, %167 : vector<2x128xf32>
    %199 = arith.mulf %183, %191 : vector<2x128xf32>
    %200 = arith.addf %198, %199 : vector<2x128xf32>
    %201 = math.tanh %200 : vector<2x128xf32>
    %202 = arith.mulf %197, %201 : vector<2x128xf32>
    %c12 = arith.constant 12 : index
    %c0_37 = arith.constant 0 : index
    %203 = vector.load %arg0[%c12, %c0_37] : memref<16x1xf32, #tpu.memory_space<vmem>>, vector<2x1xf32>
    %204 = vector.broadcast %203 : vector<2x1xf32> to vector<2x512xf32>
    %205 = vector.broadcast %0 : vector<1x512xf32> to vector<2x512xf32>
    %206 = arith.mulf %204, %205 : vector<2x512xf32>
    %207 = vector.broadcast %2 : vector<1x512xf32> to vector<2x512xf32>
    %208 = arith.addf %206, %207 : vector<2x512xf32>
    %cst_38 = arith.constant dense<0.000000e+00> : vector<2x512xf32>
    %209 = tpu.matmul %202, %1, %cst_38 {dimension_numbers = #tpu.dot_dimension_numbers<[1], [0], [0], [1], [0, 0, 1, 1], [], []>} : vector<2x128xf32>, vector<128x512xf32>, vector<2x512xf32> -> vector<2x512xf32>
    %210 = arith.addf %208, %209 : vector<2x512xf32>
    %211 = vector.extract_strided_slice %210 {offsets = [0, 0], sizes = [2, 128], strides = [1, 1]} : vector<2x512xf32> to vector<2x128xf32>
    %212 = arith.negf %211 : vector<2x128xf32>
    %213 = math.exp %212 : vector<2x128xf32>
    %cst_39 = arith.constant 1.000000e+00 : f32
    %214 = vector.broadcast %cst_39 : f32 to vector<2x128xf32>
    %215 = arith.addf %214, %213 : vector<2x128xf32>
    %216 = arith.divf %214, %215 : vector<2x128xf32>
    %217 = vector.extract_strided_slice %210 {offsets = [0, 128], sizes = [2, 128], strides = [1, 1]} : vector<2x512xf32> to vector<2x128xf32>
    %218 = arith.negf %217 : vector<2x128xf32>
    %219 = math.exp %218 : vector<2x128xf32>
    %cst_40 = arith.constant 1.000000e+00 : f32
    %220 = vector.broadcast %cst_40 : f32 to vector<2x128xf32>
    %221 = arith.addf %220, %219 : vector<2x128xf32>
    %222 = arith.divf %220, %221 : vector<2x128xf32>
    %223 = vector.extract_strided_slice %210 {offsets = [0, 256], sizes = [2, 128], strides = [1, 1]} : vector<2x512xf32> to vector<2x128xf32>
    %224 = math.tanh %223 : vector<2x128xf32>
    %225 = vector.extract_strided_slice %210 {offsets = [0, 384], sizes = [2, 128], strides = [1, 1]} : vector<2x512xf32> to vector<2x128xf32>
    %226 = arith.negf %225 : vector<2x128xf32>
    %227 = math.exp %226 : vector<2x128xf32>
    %cst_41 = arith.constant 1.000000e+00 : f32
    %228 = vector.broadcast %cst_41 : f32 to vector<2x128xf32>
    %229 = arith.addf %228, %227 : vector<2x128xf32>
    %230 = arith.divf %228, %229 : vector<2x128xf32>
    %231 = arith.mulf %222, %200 : vector<2x128xf32>
    %232 = arith.mulf %216, %224 : vector<2x128xf32>
    %233 = arith.addf %231, %232 : vector<2x128xf32>
    %234 = math.tanh %233 : vector<2x128xf32>
    %235 = arith.mulf %230, %234 : vector<2x128xf32>
    %c14 = arith.constant 14 : index
    %c0_42 = arith.constant 0 : index
    %236 = vector.load %arg0[%c14, %c0_42] : memref<16x1xf32, #tpu.memory_space<vmem>>, vector<2x1xf32>
    %237 = vector.broadcast %236 : vector<2x1xf32> to vector<2x512xf32>
    %238 = vector.broadcast %0 : vector<1x512xf32> to vector<2x512xf32>
    %239 = arith.mulf %237, %238 : vector<2x512xf32>
    %240 = vector.broadcast %2 : vector<1x512xf32> to vector<2x512xf32>
    %241 = arith.addf %239, %240 : vector<2x512xf32>
    %cst_43 = arith.constant dense<0.000000e+00> : vector<2x512xf32>
    %242 = tpu.matmul %235, %1, %cst_43 {dimension_numbers = #tpu.dot_dimension_numbers<[1], [0], [0], [1], [0, 0, 1, 1], [], []>} : vector<2x128xf32>, vector<128x512xf32>, vector<2x512xf32> -> vector<2x512xf32>
    %243 = arith.addf %241, %242 : vector<2x512xf32>
    %244 = vector.extract_strided_slice %243 {offsets = [0, 0], sizes = [2, 128], strides = [1, 1]} : vector<2x512xf32> to vector<2x128xf32>
    %245 = arith.negf %244 : vector<2x128xf32>
    %246 = math.exp %245 : vector<2x128xf32>
    %cst_44 = arith.constant 1.000000e+00 : f32
    %247 = vector.broadcast %cst_44 : f32 to vector<2x128xf32>
    %248 = arith.addf %247, %246 : vector<2x128xf32>
    %249 = arith.divf %247, %248 : vector<2x128xf32>
    %250 = vector.extract_strided_slice %243 {offsets = [0, 128], sizes = [2, 128], strides = [1, 1]} : vector<2x512xf32> to vector<2x128xf32>
    %251 = arith.negf %250 : vector<2x128xf32>
    %252 = math.exp %251 : vector<2x128xf32>
    %cst_45 = arith.constant 1.000000e+00 : f32
    %253 = vector.broadcast %cst_45 : f32 to vector<2x128xf32>
    %254 = arith.addf %253, %252 : vector<2x128xf32>
    %255 = arith.divf %253, %254 : vector<2x128xf32>
    %256 = vector.extract_strided_slice %243 {offsets = [0, 256], sizes = [2, 128], strides = [1, 1]} : vector<2x512xf32> to vector<2x128xf32>
    %257 = math.tanh %256 : vector<2x128xf32>
    %258 = vector.extract_strided_slice %243 {offsets = [0, 384], sizes = [2, 128], strides = [1, 1]} : vector<2x512xf32> to vector<2x128xf32>
    %259 = arith.negf %258 : vector<2x128xf32>
    %260 = math.exp %259 : vector<2x128xf32>
    %cst_46 = arith.constant 1.000000e+00 : f32
    %261 = vector.broadcast %cst_46 : f32 to vector<2x128xf32>
    %262 = arith.addf %261, %260 : vector<2x128xf32>
    %263 = arith.divf %261, %262 : vector<2x128xf32>
    %264 = arith.mulf %255, %233 : vector<2x128xf32>
    %265 = arith.mulf %249, %257 : vector<2x128xf32>
    %266 = arith.addf %264, %265 : vector<2x128xf32>
    %267 = math.tanh %266 : vector<2x128xf32>
    %268 = arith.mulf %263, %267 : vector<2x128xf32>
    %c0_47 = arith.constant 0 : index
    %c0_48 = arith.constant 0 : index
    %269 = vector.load %arg4[%c0_47, %c0_48] : memref<2x128xf32, #tpu.memory_space<vmem>>, vector<2x128xf32>
    tpu.vector_store %arg4[%c0_47, %c0_48], %268 {strides = array<i32>} : memref<2x128xf32, #tpu.memory_space<vmem>>, vector<2x128xf32>,
    %c0_49 = arith.constant 0 : index
    %c0_50 = arith.constant 0 : index
    %270 = vector.load %arg5[%c0_49, %c0_50] : memref<2x128xf32, #tpu.memory_space<vmem>>, vector<2x128xf32>
    tpu.vector_store %arg5[%c0_49, %c0_50], %266 {strides = array<i32>} : memref<2x128xf32, #tpu.memory_space<vmem>>, vector<2x128xf32>,
    return
  }
}

</mosaic_0001>

<llo_original>
// kernel: encoder_forward.1
$region0: #{encoder_forward.1}
  #allocation0 [shape = 'u32[]', space=smem, size = 0x4, offset = 0x4, fixed_abs, tag = 'smem constant byte address 0x4 - core index']
  #allocation1 [shape = 'u32[144,128]{1,0:T(1,128)}', space=vmem, size = 0x12000, scoped, tag = 'internal scratch']
  %s0 = inlined_call_operand.vmem [shape: f32[16,1], index: 0, kind: input, shape index: {}]
  %s1 = inlined_call_operand.vmem [shape: f32[1,512], index: 1, kind: input, shape index: {}]
  %s2 = inlined_call_operand.hbm [shape: f32[128,512], index: 2, kind: input, shape index: {}]
  %s3 = inlined_call_operand.vmem [shape: f32[1,512], index: 3, kind: input, shape index: {}]
  %s4 = inlined_call_operand.hbm [shape: f32[2,128], index: 4, kind: output, shape index: {0}]
  %s5 = inlined_call_operand.hbm [shape: f32[2,128], index: 5, kind: output, shape index: {1}]
  %6 = xla_tuple %s4, %s5
  %s7 = sld [smem:[#allocation0]]
  $region38: #{encoder_forward.1} parent=0
    _
  %s9 = ssub.s32 1, %s7
  %s10 = scalar_select 0, %s9, %s7
  $region1: #{encoder_forward.1} parent=0
    #allocation2 [shape = 'u8[262144]{0}', space=vmem, size = 0x40000, scoped, tag = 'input window, operand 2, single buffered']
    #allocation3 [shape = 's32[1]{0}', space=sflag, size = 0x4, scoped, tag = 'scoped memory for encoder_forward.1']
    #allocation4 [shape = 's32[1]{0}', space=sflag, size = 0x4, scoped, tag = 'scoped memory for encoder_forward.1']
    #allocation5 [shape = 'u8[1024]{0}', space=vmem, size = 0x400, scoped, tag = 'output window, operand 0, single buffered']
    #allocation6 [shape = 'u8[1024]{0}', space=vmem, size = 0x400, scoped, tag = 'output window, operand 1, single buffered']
    #allocation7 [shape = 's32[1]{0}', space=sflag, size = 0x4, scoped, tag = 'scoped memory for encoder_forward.1']
    %11 = vsyncpa [#allocation3], 0
    %12 = vsyncpa [#allocation4], 0
    %13 = vsyncpa [#allocation7], 0
    // Predicated region
    $region2: #{encoder_forward.1} parent=1 // pred_check
      _
    $region3: #{encoder_forward.1} parent=1 // pred_check_branch
      %15 = sbr.rel (0) target = $region5
    $region4: #{encoder_forward.1} parent=1 // pred_region
      _
    $region5: #{encoder_forward.1} parent=1 // pred_fallthru
      _
    // Predicated region
    $region6: #{encoder_forward.1} parent=1 // pred_check
      _
    $region7: #{encoder_forward.1} parent=1 // pred_check_branch
      %17 = sbr.rel (0) target = $region9
    $region8: #{encoder_forward.1} parent=1 // pred_region
      _
    $region9: #{encoder_forward.1} parent=1 // pred_fallthru
      _
    // Predicated region
    $region10: #{encoder_forward.1} parent=1 // pred_check
      _
    $region11: #{encoder_forward.1} parent=1 // pred_check_branch
      %19 = sbr.rel (0) target = $region13
    $region12: #{encoder_forward.1} parent=1 // pred_region
      %s21 = ssub.s32 8192, 8192
      %22 = vsyncadd [#allocation3], %s21
      %s23 = sshll.u32 [#allocation2], 4
      %s24 = int_to_ptr.vmem [resolvable:$true] %s23
      %29 = dma.hbm_to_vmem [thread:$0]  %s2, 8192, %s24, [#allocation3], 512, 512, 32
    $region13: #{encoder_forward.1} parent=1 // pred_fallthru
      _
    // Predicated region
    $region14: #{encoder_forward.1} parent=1 // pred_check
      _
    $region15: #{encoder_forward.1} parent=1 // pred_check_branch
      %31 = sbr.rel (0) target = $region17
    $region16: #{encoder_forward.1} parent=1 // pred_region
      _
    $region17: #{encoder_forward.1} parent=1 // pred_fallthru
      _
    // Predicated region
    $region18: #{encoder_forward.1} parent=1 // pred_check
      _
    $region19: #{encoder_forward.1} parent=1 // pred_check_branch
      %33 = sbr.rel (0) target = $region21
    $region20: #{encoder_forward.1} parent=1 // pred_region
      %34 = dma.done [#allocation3], 8192
    $region21: #{encoder_forward.1} parent=1 // pred_fallthru
      _
    %v35 = vld [vmem:[%s1] sm:$0xf]
    %v36 = vld [vmem:[#allocation2] sm:$0xff]
    %v37 = vld [vmem:[#allocation2 + $0x8] sm:$0xff]
    %v38 = vld [vmem:[#allocation2 + $0x10] sm:$0xff]
    %v39 = vld [vmem:[#allocation2 + $0x18] sm:$0xff]
    %v40 = vld [vmem:[#allocation2 + $0x20] sm:$0xff]
    %v41 = vld [vmem:[#allocation2 + $0x28] sm:$0xff]
    %v42 = vld [vmem:[#allocation2 + $0x30] sm:$0xff]
    %v43 = vld [vmem:[#allocation2 + $0x38] sm:$0xff]
    %v44 = vld [vmem:[#allocation2 + $0x40] sm:$0xff]
    %v45 = vld [vmem:[#allocation2 + $0x48] sm:$0xff]
    %v46 = vld [vmem:[#allocation2 + $0x50] sm:$0xff]
    %v47 = vld [vmem:[#allocation2 + $0x58] sm:$0xff]
    %v48 = vld [vmem:[#allocation2 + $0x60] sm:$0xff]
    %v49 = vld [vmem:[#allocation2 + $0x68] sm:$0xff]
    %v50 = vld [vmem:[#allocation2 + $0x70] sm:$0xff]
    %v51 = vld [vmem:[#allocation2 + $0x78] sm:$0xff]
    %v52 = vld [vmem:[#allocation2 + $0x80] sm:$0xff]
    %v53 = vld [vmem:[#allocation2 + $0x88] sm:$0xff]
    %v54 = vld [vmem:[#allocation2 + $0x90] sm:$0xff]
    %v55 = vld [vmem:[#allocation2 + $0x98] sm:$0xff]
    %v56 = vld [vmem:[#allocation2 + $0xa0] sm:$0xff]
    %v57 = vld [vmem:[#allocation2 + $0xa8] sm:$0xff]
    %v58 = vld [vmem:[#allocation2 + $0xb0] sm:$0xff]
    %v59 = vld [vmem:[#allocation2 + $0xb8] sm:$0xff]
    %v60 = vld [vmem:[#allocation2 + $0xc0] sm:$0xff]
    %v61 = vld [vmem:[#allocation2 + $0xc8] sm:$0xff]
    %v62 = vld [vmem:[#allocation2 + $0xd0] sm:$0xff]
    %v63 = vld [vmem:[#allocation2 + $0xd8] sm:$0xff]
    %v64 = vld [vmem:[#allocation2 + $0xe0] sm:$0xff]
    %v65 = vld [vmem:[#allocation2 + $0xe8] sm:$0xff]
    %v66 = vld [vmem:[#allocation2 + $0xf0] sm:$0xff]
    %v67 = vld [vmem:[#allocation2 + $0xf8] sm:$0xff]
    %v68 = vld [vmem:[#allocation2 + $0x100] sm:$0xff]
    %v69 = vld [vmem:[#allocation2 + $0x108] sm:$0xff]
    %v70 = vld [vmem:[#allocation2 + $0x110] sm:$0xff]
    %v71 = vld [vmem:[#allocation2 + $0x118] sm:$0xff]
    %v72 = vld [vmem:[#allocation2 + $0x120] sm:$0xff]
    %v73 = vld [vmem:[#allocation2 + $0x128] sm:$0xff]
    %v74 = vld [vmem:[#allocation2 + $0x130] sm:$0xff]
    %v75 = vld [vmem:[#allocation2 + $0x138] sm:$0xff]
    %v76 = vld [vmem:[#allocation2 + $0x140] sm:$0xff]
    %v77 = vld [vmem:[#allocation2 + $0x148] sm:$0xff]
    %v78 = vld [vmem:[#allocation2 + $0x150] sm:$0xff]
    %v79 = vld [vmem:[#allocation2 + $0x158] sm:$0xff]
    %v80 = vld [vmem:[#allocation2 + $0x160] sm:$0xff]
    %v81 = vld [vmem:[#allocation2 + $0x168] sm:$0xff]
    %v82 = vld [vmem:[#allocation2 + $0x170] sm:$0xff]
    %v83 = vld [vmem:[#allocation2 + $0x178] sm:$0xff]
    %v84 = vld [vmem:[#allocation2 + $0x180] sm:$0xff]
    %v85 = vld [vmem:[#allocation2 + $0x188] sm:$0xff]
    %v86 = vld [vmem:[#allocation2 + $0x190] sm:$0xff]
    %v87 = vld [vmem:[#allocation2 + $0x198] sm:$0xff]
    %v88 = vld [vmem:[#allocation2 + $0x1a0] sm:$0xff]
    %v89 = vld [vmem:[#allocation2 + $0x1a8] sm:$0xff]
    %v90 = vld [vmem:[#allocation2 + $0x1b0] sm:$0xff]
    %v91 = vld [vmem:[#allocation2 + $0x1b8] sm:$0xff]
    %v92 = vld [vmem:[#allocation2 + $0x1c0] sm:$0xff]
    %v93 = vld [vmem:[#allocation2 + $0x1c8] sm:$0xff]
    %v94 = vld [vmem:[#allocation2 + $0x1d0] sm:$0xff]
    %v95 = vld [vmem:[#allocation2 + $0x1d8] sm:$0xff]
    %v96 = vld [vmem:[#allocation2 + $0x1e0] sm:$0xff]
    %v97 = vld [vmem:[#allocation2 + $0x1e8] sm:$0xff]
    %v98 = vld [vmem:[#allocation2 + $0x1f0] sm:$0xff]
    %v99 = vld [vmem:[#allocation2 + $0x1f8] sm:$0xff]
    %v100 = vld [vmem:[%s3] sm:$0xf]
    %v101 = vld [vmem:[%s0] sm:$0x3]
    %103 = vset.pattern.permute.xlu0 0
    %104 = vperm.xlu0 %103, %v101
    %v105 = vpop.permute.xlu0 %104
    %v108 = vlaneseq
    %v109 = vshrl.u32 %v108, 7
    %v110 = vsub.s32 0, %v109
    %v111 = vrot.slane %v35, %v110
    %v112 = vlaneseq
    %v113 = vshrl.u32 %v112, 7
    %v114 = vsub.s32 1, %v113
    %v115 = vrot.slane %v35, %v114
    %v116 = vlaneseq
    %v117 = vshrl.u32 %v116, 7
    %v118 = vsub.s32 2, %v117
    %v119 = vrot.slane %v35, %v118
    %v120 = vlaneseq
    %v121 = vshrl.u32 %v120, 7
    %v122 = vsub.s32 3, %v121
    %v123 = vrot.slane %v35, %v122
    %v128 = vmul.f32 %v105, %v111
    %v129 = vmul.f32 %v105, %v115
    %v130 = vmul.f32 %v105, %v119
    %v131 = vmul.f32 %v105, %v123
    %v133 = vlaneseq
    %v134 = vshrl.u32 %v133, 7
    %v135 = vsub.s32 0, %v134
    %v136 = vrot.slane %v100, %v135
    %v137 = vlaneseq
    %v138 = vshrl.u32 %v137, 7
    %v139 = vsub.s32 1, %v138
    %v140 = vrot.slane %v100, %v139
    %v141 = vlaneseq
    %v142 = vshrl.u32 %v141, 7
    %v143 = vsub.s32 2, %v142
    %v144 = vrot.slane %v100, %v143
    %v145 = vlaneseq
    %v146 = vshrl.u32 %v145, 7
    %v147 = vsub.s32 3, %v146
    %v148 = vrot.slane %v100, %v147
    %v153 = vadd.f32 %v128, %v136
    %v154 = vadd.f32 %v129, %v140
    %v155 = vadd.f32 %v130, %v144
    %v156 = vadd.f32 %v131, %v148
    %157 = vmatprep.subr.mxu0 %v37
    %158 = vmatpush1.msra.mxu0 %v36
    %159 = vmatprep.subr.mxu0 %v41
    %160 = vmatpush1.msra.mxu0 %v40
    %161 = vmatprep.subr.mxu0 %v45
    %162 = vmatpush1.msra.mxu0 %v44
    %163 = vmatprep.subr.mxu0 %v49
    %164 = vmatpush1.msra.mxu0 %v48
    %165 = vmatprep.subr.mxu0 %v53
    %166 = vmatpush1.msra.mxu0 %v52
    %167 = vmatprep.subr.mxu0 %v57
    %168 = vmatpush1.msra.mxu0 %v56
    %169 = vmatprep.subr.mxu0 %v61
    %170 = vmatpush1.msra.mxu0 %v60
    %171 = vmatprep.subr.mxu0 %v65
    %172 = vmatpush1.msra.mxu0 %v64
    %173 = vmatprep.subr.mxu0 %v69
    %174 = vmatpush1.msra.mxu0 %v68
    %175 = vmatprep.subr.mxu0 %v73
    %176 = vmatpush1.msra.mxu0 %v72
    %177 = vmatprep.subr.mxu0 %v77
    %178 = vmatpush1.msra.mxu0 %v76
    %179 = vmatprep.subr.mxu0 %v81
    %180 = vmatpush1.msra.mxu0 %v80
    %181 = vmatprep.subr.mxu0 %v85
    %182 = vmatpush1.msra.mxu0 %v84
    %183 = vmatprep.subr.mxu0 %v89
    %184 = vmatpush1.msra.mxu0 %v88
    %185 = vmatprep.subr.mxu0 %v93
    %186 = vmatpush1.msra.mxu0 %v92
    %187 = vmatprep.subr.mxu0 %v97
    %188 = vmatpush1.msra.mxu0 %v96
    %189 = vmatprep.subr.mxu0 0.0
    %190 = vmatpush1.msra.mxu0 0.0
    %191 = vmatprep.subr.mxu0 0.0
    %192 = vmatpush1.msra.mxu0 0.0
    %193 = vmatprep.subr.mxu0 0.0
    %194 = vmatpush1.msra.mxu0 0.0
    %195 = vmatprep.subr.mxu0 0.0
    %196 = vmatpush1.msra.mxu0 0.0
    %197 = vmatprep.subr.mxu0 0.0
    %198 = vmatpush1.msra.mxu0 0.0
    %199 = vmatprep.subr.mxu0 0.0
    %200 = vmatpush1.msra.mxu0 0.0
    %201 = vmatprep.subr.mxu0 0.0
    %202 = vmatpush1.msra.mxu0 0.0
    %203 = vmatprep.subr.mxu0 0.0
    %204 = vmatpush1.msra.mxu0 0.0
    %205 = vmatprep.subr.mxu0 0.0
    %206 = vmatpush1.msra.mxu0 0.0
    %207 = vmatprep.subr.mxu0 0.0
    %208 = vmatpush1.msra.mxu0 0.0
    %209 = vmatprep.subr.mxu0 0.0
    %210 = vmatpush1.msra.mxu0 0.0
    %211 = vmatprep.subr.mxu0 0.0
    %212 = vmatpush1.msra.mxu0 0.0
    %213 = vmatprep.subr.mxu0 0.0
    %214 = vmatpush1.msra.mxu0 0.0
    %215 = vmatprep.subr.mxu0 0.0
    %216 = vmatpush1.msra.mxu0 0.0
    %217 = vmatprep.subr.mxu0 0.0
    %218 = vmatpush1.msra.mxu0 0.0
    %219 = vmatprep.subr.mxu0 0.0
    %220 = vmatpush1.msra.mxu0 0.0
    %221 = vmatprep.mubr.f32.mxu0 0.0
    %222 = vmatmul.mubr.f32.gmra.mrb[0].mxu0 0.0
    %v223 = vpop.f32.mrb[0].mxu0
    %v224 = vadd.f32 0.0, %v223
    %v225 = vpop.f32.mrb[0].mxu0
    %v226 = vadd.f32 0.0, %v225
    %227 = vdwg.mxu0
    %228 = vmatprep.subr.mxu0 %v39
    %229 = vmatpush1.msra.mxu0 %v38
    %230 = vmatprep.subr.mxu0 %v43
    %231 = vmatpush1.msra.mxu0 %v42
    %232 = vmatprep.subr.mxu0 %v47
    %233 = vmatpush1.msra.mxu0 %v46
    %234 = vmatprep.subr.mxu0 %v51
    %235 = vmatpush1.msra.mxu0 %v50
    %236 = vmatprep.subr.mxu0 %v55
    %237 = vmatpush1.msra.mxu0 %v54
    %238 = vmatprep.subr.mxu0 %v59
    %239 = vmatpush1.msra.mxu0 %v58
    %240 = vmatprep.subr.mxu0 %v63
    %241 = vmatpush1.msra.mxu0 %v62
    %242 = vmatprep.subr.mxu0 %v67
    %243 = vmatpush1.msra.mxu0 %v66
    %244 = vmatprep.subr.mxu0 %v71
    %245 = vmatpush1.msra.mxu0 %v70
    %246 = vmatprep.subr.mxu0 %v75
    %247 = vmatpush1.msra.mxu0 %v74
    %248 = vmatprep.subr.mxu0 %v79
    %249 = vmatpush1.msra.mxu0 %v78
    %250 = vmatprep.subr.mxu0 %v83
    %251 = vmatpush1.msra.mxu0 %v82
    %252 = vmatprep.subr.mxu0 %v87
    %253 = vmatpush1.msra.mxu0 %v86
    %254 = vmatprep.subr.mxu0 %v91
    %255 = vmatpush1.msra.mxu0 %v90
    %256 = vmatprep.subr.mxu0 %v95
    %257 = vmatpush1.msra.mxu0 %v94
    %258 = vmatprep.subr.mxu0 %v99
    %259 = vmatpush1.msra.mxu0 %v98
    %260 = vmatprep.subr.mxu0 0.0
    %261 = vmatpush1.msra.mxu0 0.0
    %262 = vmatprep.subr.mxu0 0.0
    %263 = vmatpush1.msra.mxu0 0.0
    %264 = vmatprep.subr.mxu0 0.0
    %265 = vmatpush1.msra.mxu0 0.0
    %266 = vmatprep.subr.mxu0 0.0
    %267 = vmatpush1.msra.mxu0 0.0
    %268 = vmatprep.subr.mxu0 0.0
    %269 = vmatpush1.msra.mxu0 0.0
    %270 = vmatprep.subr.mxu0 0.0
    %271 = vmatpush1.msra.mxu0 0.0
    %272 = vmatprep.subr.mxu0 0.0
    %273 = vmatpush1.msra.mxu0 0.0
    %274 = vmatprep.subr.mxu0 0.0
    %275 = vmatpush1.msra.mxu0 0.0
    %276 = vmatprep.subr.mxu0 0.0
    %277 = vmatpush1.msra.mxu0 0.0
    %278 = vmatprep.subr.mxu0 0.0
    %279 = vmatpush1.msra.mxu0 0.0
    %280 = vmatprep.subr.mxu0 0.0
    %281 = vmatpush1.msra.mxu0 0.0
    %282 = vmatprep.subr.mxu0 0.0
    %283 = vmatpush1.msra.mxu0 0.0
    %284 = vmatprep.subr.mxu0 0.0
    %285 = vmatpush1.msra.mxu0 0.0
    %286 = vmatprep.subr.mxu0 0.0
    %287 = vmatpush1.msra.mxu0 0.0
    %288 = vmatprep.subr.mxu0 0.0
    %289 = vmatpush1.msra.mxu0 0.0
    %290 = vmatprep.subr.mxu0 0.0
    %291 = vmatpush1.msra.mxu0 0.0
    %292 = vmatprep.mubr.f32.mxu0 0.0
    %293 = vmatmul.mubr.f32.gmra.mrb[0].mxu0 0.0
    %v294 = vpop.f32.mrb[0].mxu0
    %v295 = vadd.f32 0.0, %v294
    %v296 = vpop.f32.mrb[0].mxu0
    %v297 = vadd.f32 0.0, %v296
    %298 = vdwg.mxu0
    %v299 = vadd.f32 %v153, %v224
    %v300 = vadd.f32 %v154, %v226
    %v301 = vadd.f32 %v155, %v295
    %v302 = vadd.f32 %v156, %v297
    %v303 = vxor.u32 %v299, 2147483648
    %v304 = vmul.f32 %v303, 1.442695
    %v305 = vpow.pop %v304
    %v306 = vadd.f32 %v305, 1.0
    %v307 = vrcp.pop %v306
    %v308 = vmul.f32 1.0, %v307
    %v309 = vxor.u32 %v300, 2147483648
    %v310 = vmul.f32 %v309, 1.442695
    %v311 = vpow.pop %v310
    %v312 = vadd.f32 %v311, 1.0
    %v313 = vrcp.pop %v312
    %v314 = vmul.f32 1.0, %v313
    %v315 = vtanh.pop %v301
    %v316 = vxor.u32 %v302, 2147483648
    %v317 = vmul.f32 %v316, 1.442695
    %v318 = vpow.pop %v317
    %v319 = vadd.f32 %v318, 1.0
    %v320 = vrcp.pop %v319
    %v321 = vmul.f32 1.0, %v320
    %v322 = vmul.f32 %v314, 0.0
    %v323 = vmul.f32 %v308, %v315
    %v324 = vadd.f32 %v322, %v323
    %v325 = vtanh.pop %v324
    %v326 = vmul.f32 %v321, %v325
    %v327 = vld [vmem:[%s0 + $0x2] sm:$0x3]
    %329 = vset.pattern.permute.xlu0 0
    %330 = vperm.xlu0 %329, %v327
    %v331 = vpop.permute.xlu0 %330
    %v333 = vmul.f32 %v331, %v111
    %v334 = vmul.f32 %v331, %v115
    %v335 = vmul.f32 %v331, %v119
    %v336 = vmul.f32 %v331, %v123
    %v337 = vadd.f32 %v333, %v136
    %v338 = vadd.f32 %v334, %v140
    %v339 = vadd.f32 %v335, %v144
    %v340 = vadd.f32 %v336, %v148
    %341 = vmatprep.subr.mxu0 %v37
    %342 = vmatpush1.msra.mxu0 %v36
    %343 = vmatprep.subr.mxu0 %v41
    %344 = vmatpush1.msra.mxu0 %v40
    %345 = vmatprep.subr.mxu0 %v45
    %346 = vmatpush1.msra.mxu0 %v44
    %347 = vmatprep.subr.mxu0 %v49
    %348 = vmatpush1.msra.mxu0 %v48
    %349 = vmatprep.subr.mxu0 %v53
    %350 = vmatpush1.msra.mxu0 %v52
    %351 = vmatprep.subr.mxu0 %v57
    %352 = vmatpush1.msra.mxu0 %v56
    %353 = vmatprep.subr.mxu0 %v61
    %354 = vmatpush1.msra.mxu0 %v60
    %355 = vmatprep.subr.mxu0 %v65
    %356 = vmatpush1.msra.mxu0 %v64
    %357 = vmatprep.subr.mxu0 %v69
    %358 = vmatpush1.msra.mxu0 %v68
    %359 = vmatprep.subr.mxu0 %v73
    %360 = vmatpush1.msra.mxu0 %v72
    %361 = vmatprep.subr.mxu0 %v77
    %362 = vmatpush1.msra.mxu0 %v76
    %363 = vmatprep.subr.mxu0 %v81
    %364 = vmatpush1.msra.mxu0 %v80
    %365 = vmatprep.subr.mxu0 %v85
    %366 = vmatpush1.msra.mxu0 %v84
    %367 = vmatprep.subr.mxu0 %v89
    %368 = vmatpush1.msra.mxu0 %v88
    %369 = vmatprep.subr.mxu0 %v93
    %370 = vmatpush1.msra.mxu0 %v92
    %371 = vmatprep.subr.mxu0 %v97
    %372 = vmatpush1.msra.mxu0 %v96
    %373 = vmatprep.subr.mxu0 0.0
    %374 = vmatpush1.msra.mxu0 0.0
    %375 = vmatprep.subr.mxu0 0.0
    %376 = vmatpush1.msra.mxu0 0.0
    %377 = vmatprep.subr.mxu0 0.0
    %378 = vmatpush1.msra.mxu0 0.0
    %379 = vmatprep.subr.mxu0 0.0
    %380 = vmatpush1.msra.mxu0 0.0
    %381 = vmatprep.subr.mxu0 0.0
    %382 = vmatpush1.msra.mxu0 0.0
    %383 = vmatprep.subr.mxu0 0.0
    %384 = vmatpush1.msra.mxu0 0.0
    %385 = vmatprep.subr.mxu0 0.0
    %386 = vmatpush1.msra.mxu0 0.0
    %387 = vmatprep.subr.mxu0 0.0
    %388 = vmatpush1.msra.mxu0 0.0
    %389 = vmatprep.subr.mxu0 0.0
    %390 = vmatpush1.msra.mxu0 0.0
    %391 = vmatprep.subr.mxu0 0.0
    %392 = vmatpush1.msra.mxu0 0.0
    %393 = vmatprep.subr.mxu0 0.0
    %394 = vmatpush1.msra.mxu0 0.0
    %395 = vmatprep.subr.mxu0 0.0
    %396 = vmatpush1.msra.mxu0 0.0
    %397 = vmatprep.subr.mxu0 0.0
    %398 = vmatpush1.msra.mxu0 0.0
    %399 = vmatprep.subr.mxu0 0.0
    %400 = vmatpush1.msra.mxu0 0.0
    %401 = vmatprep.subr.mxu0 0.0
    %402 = vmatpush1.msra.mxu0 0.0
    %403 = vmatprep.subr.mxu0 0.0
    %404 = vmatpush1.msra.mxu0 0.0
    %405 = vmatprep.mubr.f32.mxu0 0.0
    %406 = vmatmul.mubr.f32.gmra.mrb[0].mxu0 %v326
    %v407 = vpop.f32.mrb[0].mxu0
    %v408 = vadd.f32 0.0, %v407
    %v409 = vpop.f32.mrb[0].mxu0
    %v410 = vadd.f32 0.0, %v409
    %411 = vdwg.mxu0
    %412 = vmatprep.subr.mxu0 %v39
    %413 = vmatpush1.msra.mxu0 %v38
    %414 = vmatprep.subr.mxu0 %v43
    %415 = vmatpush1.msra.mxu0 %v42
    %416 = vmatprep.subr.mxu0 %v47
    %417 = vmatpush1.msra.mxu0 %v46
    %418 = vmatprep.subr.mxu0 %v51
    %419 = vmatpush1.msra.mxu0 %v50
    %420 = vmatprep.subr.mxu0 %v55
    %421 = vmatpush1.msra.mxu0 %v54
    %422 = vmatprep.subr.mxu0 %v59
    %423 = vmatpush1.msra.mxu0 %v58
    %424 = vmatprep.subr.mxu0 %v63
    %425 = vmatpush1.msra.mxu0 %v62
    %426 = vmatprep.subr.mxu0 %v67
    %427 = vmatpush1.msra.mxu0 %v66
    %428 = vmatprep.subr.mxu0 %v71
    %429 = vmatpush1.msra.mxu0 %v70
    %430 = vmatprep.subr.mxu0 %v75
    %431 = vmatpush1.msra.mxu0 %v74
    %432 = vmatprep.subr.mxu0 %v79
    %433 = vmatpush1.msra.mxu0 %v78
    %434 = vmatprep.subr.mxu0 %v83
    %435 = vmatpush1.msra.mxu0 %v82
    %436 = vmatprep.subr.mxu0 %v87
    %437 = vmatpush1.msra.mxu0 %v86
    %438 = vmatprep.subr.mxu0 %v91
    %439 = vmatpush1.msra.mxu0 %v90
    %440 = vmatprep.subr.mxu0 %v95
    %441 = vmatpush1.msra.mxu0 %v94
    %442 = vmatprep.subr.mxu0 %v99
    %443 = vmatpush1.msra.mxu0 %v98
    %444 = vmatprep.subr.mxu0 0.0
    %445 = vmatpush1.msra.mxu0 0.0
    %446 = vmatprep.subr.mxu0 0.0
    %447 = vmatpush1.msra.mxu0 0.0
    %448 = vmatprep.subr.mxu0 0.0
    %449 = vmatpush1.msra.mxu0 0.0
    %450 = vmatprep.subr.mxu0 0.0
    %451 = vmatpush1.msra.mxu0 0.0
    %452 = vmatprep.subr.mxu0 0.0
    %453 = vmatpush1.msra.mxu0 0.0
    %454 = vmatprep.subr.mxu0 0.0
    %455 = vmatpush1.msra.mxu0 0.0
    %456 = vmatprep.subr.mxu0 0.0
    %457 = vmatpush1.msra.mxu0 0.0
    %458 = vmatprep.subr.mxu0 0.0
    %459 = vmatpush1.msra.mxu0 0.0
    %460 = vmatprep.subr.mxu0 0.0
    %461 = vmatpush1.msra.mxu0 0.0
    %462 = vmatprep.subr.mxu0 0.0
    %463 = vmatpush1.msra.mxu0 0.0
    %464 = vmatprep.subr.mxu0 0.0
    %465 = vmatpush1.msra.mxu0 0.0
    %466 = vmatprep.subr.mxu0 0.0
    %467 = vmatpush1.msra.mxu0 0.0
    %468 = vmatprep.subr.mxu0 0.0
    %469 = vmatpush1.msra.mxu0 0.0
    %470 = vmatprep.subr.mxu0 0.0
    %471 = vmatpush1.msra.mxu0 0.0
    %472 = vmatprep.subr.mxu0 0.0
    %473 = vmatpush1.msra.mxu0 0.0
    %474 = vmatprep.subr.mxu0 0.0
    %475 = vmatpush1.msra.mxu0 0.0
    %476 = vmatprep.mubr.f32.mxu0 0.0
    %477 = vmatmul.mubr.f32.gmra.mrb[0].mxu0 %v326
    %v478 = vpop.f32.mrb[0].mxu0
    %v479 = vadd.f32 0.0, %v478
    %v480 = vpop.f32.mrb[0].mxu0
    %v481 = vadd.f32 0.0, %v480
    %482 = vdwg.mxu0
    %v483 = vadd.f32 %v337, %v408
    %v484 = vadd.f32 %v338, %v410
    %v485 = vadd.f32 %v339, %v479
    %v486 = vadd.f32 %v340, %v481
    %v487 = vxor.u32 %v483, 2147483648
    %v488 = vmul.f32 %v487, 1.442695
    %v489 = vpow.pop %v488
    %v490 = vadd.f32 %v489, 1.0
    %v491 = vrcp.pop %v490
    %v492 = vmul.f32 1.0, %v491
    %v493 = vxor.u32 %v484, 2147483648
    %v494 = vmul.f32 %v493, 1.442695
    %v495 = vpow.pop %v494
    %v496 = vadd.f32 %v495, 1.0
    %v497 = vrcp.pop %v496
    %v498 = vmul.f32 1.0, %v497
    %v499 = vtanh.pop %v485
    %v500 = vxor.u32 %v486, 2147483648
    %v501 = vmul.f32 %v500, 1.442695
    %v502 = vpow.pop %v501
    %v503 = vadd.f32 %v502, 1.0
    %v504 = vrcp.pop %v503
    %v505 = vmul.f32 1.0, %v504
    %v506 = vmul.f32 %v498, %v324
    %v507 = vmul.f32 %v492, %v499
    %v508 = vadd.f32 %v506, %v507
    %v509 = vtanh.pop %v508
    %v510 = vmul.f32 %v505, %v509
    %v511 = vld [vmem:[%s0 + $0x4] sm:$0x3]
    %513 = vset.pattern.permute.xlu0 0
    %514 = vperm.xlu0 %513, %v511
    %v515 = vpop.permute.xlu0 %514
    %v517 = vmul.f32 %v515, %v111
    %v518 = vmul.f32 %v515, %v115
    %v519 = vmul.f32 %v515, %v119
    %v520 = vmul.f32 %v515, %v123
    %v521 = vadd.f32 %v517, %v136
    %v522 = vadd.f32 %v518, %v140
    %v523 = vadd.f32 %v519, %v144
    %v524 = vadd.f32 %v520, %v148
    %525 = vmatprep.subr.mxu0 %v37
    %526 = vmatpush1.msra.mxu0 %v36
    %527 = vmatprep.subr.mxu0 %v41
    %528 = vmatpush1.msra.mxu0 %v40
    %529 = vmatprep.subr.mxu0 %v45
    %530 = vmatpush1.msra.mxu0 %v44
    %531 = vmatprep.subr.mxu0 %v49
    %532 = vmatpush1.msra.mxu0 %v48
    %533 = vmatprep.subr.mxu0 %v53
    %534 = vmatpush1.msra.mxu0 %v52
    %535 = vmatprep.subr.mxu0 %v57
    %536 = vmatpush1.msra.mxu0 %v56
    %537 = vmatprep.subr.mxu0 %v61
    %538 = vmatpush1.msra.mxu0 %v60
    %539 = vmatprep.subr.mxu0 %v65
    %540 = vmatpush1.msra.mxu0 %v64
    %541 = vmatprep.subr.mxu0 %v69
    %542 = vmatpush1.msra.mxu0 %v68
    %543 = vmatprep.subr.mxu0 %v73
    %544 = vmatpush1.msra.mxu0 %v72
    %545 = vmatprep.subr.mxu0 %v77
    %546 = vmatpush1.msra.mxu0 %v76
    %547 = vmatprep.subr.mxu0 %v81
    %548 = vmatpush1.msra.mxu0 %v80
    %549 = vmatprep.subr.mxu0 %v85
    %550 = vmatpush1.msra.mxu0 %v84
    %551 = vmatprep.subr.mxu0 %v89
    %552 = vmatpush1.msra.mxu0 %v88
    %553 = vmatprep.subr.mxu0 %v93
    %554 = vmatpush1.msra.mxu0 %v92
    %555 = vmatprep.subr.mxu0 %v97
    %556 = vmatpush1.msra.mxu0 %v96
    %557 = vmatprep.subr.mxu0 0.0
    %558 = vmatpush1.msra.mxu0 0.0
    %559 = vmatprep.subr.mxu0 0.0
    %560 = vmatpush1.msra.mxu0 0.0
    %561 = vmatprep.subr.mxu0 0.0
    %562 = vmatpush1.msra.mxu0 0.0
    %563 = vmatprep.subr.mxu0 0.0
    %564 = vmatpush1.msra.mxu0 0.0
    %565 = vmatprep.subr.mxu0 0.0
    %566 = vmatpush1.msra.mxu0 0.0
    %567 = vmatprep.subr.mxu0 0.0
    %568 = vmatpush1.msra.mxu0 0.0
    %569 = vmatprep.subr.mxu0 0.0
    %570 = vmatpush1.msra.mxu0 0.0
    %571 = vmatprep.subr.mxu0 0.0
    %572 = vmatpush1.msra.mxu0 0.0
    %573 = vmatprep.subr.mxu0 0.0
    %574 = vmatpush1.msra.mxu0 0.0
    %575 = vmatprep.subr.mxu0 0.0
    %576 = vmatpush1.msra.mxu0 0.0
    %577 = vmatprep.subr.mxu0 0.0
    %578 = vmatpush1.msra.mxu0 0.0
    %579 = vmatprep.subr.mxu0 0.0
    %580 = vmatpush1.msra.mxu0 0.0
    %581 = vmatprep.subr.mxu0 0.0
    %582 = vmatpush1.msra.mxu0 0.0
    %583 = vmatprep.subr.mxu0 0.0
    %584 = vmatpush1.msra.mxu0 0.0
    %585 = vmatprep.subr.mxu0 0.0
    %586 = vmatpush1.msra.mxu0 0.0
    %587 = vmatprep.subr.mxu0 0.0
    %588 = vmatpush1.msra.mxu0 0.0
    %589 = vmatprep.mubr.f32.mxu0 0.0
    %590 = vmatmul.mubr.f32.gmra.mrb[0].mxu0 %v510
    %v591 = vpop.f32.mrb[0].mxu0
    %v592 = vadd.f32 0.0, %v591
    %v593 = vpop.f32.mrb[0].mxu0
    %v594 = vadd.f32 0.0, %v593
    %595 = vdwg.mxu0
    %596 = vmatprep.subr.mxu0 %v39
    %597 = vmatpush1.msra.mxu0 %v38
    %598 = vmatprep.subr.mxu0 %v43
    %599 = vmatpush1.msra.mxu0 %v42
    %600 = vmatprep.subr.mxu0 %v47
    %601 = vmatpush1.msra.mxu0 %v46
    %602 = vmatprep.subr.mxu0 %v51
    %603 = vmatpush1.msra.mxu0 %v50
    %604 = vmatprep.subr.mxu0 %v55
    %605 = vmatpush1.msra.mxu0 %v54
    %606 = vmatprep.subr.mxu0 %v59
    %607 = vmatpush1.msra.mxu0 %v58
    %608 = vmatprep.subr.mxu0 %v63
    %609 = vmatpush1.msra.mxu0 %v62
    %610 = vmatprep.subr.mxu0 %v67
    %611 = vmatpush1.msra.mxu0 %v66
    %612 = vmatprep.subr.mxu0 %v71
    %613 = vmatpush1.msra.mxu0 %v70
    %614 = vmatprep.subr.mxu0 %v75
    %615 = vmatpush1.msra.mxu0 %v74
    %616 = vmatprep.subr.mxu0 %v79
    %617 = vmatpush1.msra.mxu0 %v78
    %618 = vmatprep.subr.mxu0 %v83
    %619 = vmatpush1.msra.mxu0 %v82
    %620 = vmatprep.subr.mxu0 %v87
    %621 = vmatpush1.msra.mxu0 %v86
    %622 = vmatprep.subr.mxu0 %v91
    %623 = vmatpush1.msra.mxu0 %v90
    %624 = vmatprep.subr.mxu0 %v95
    %625 = vmatpush1.msra.mxu0 %v94
    %626 = vmatprep.subr.mxu0 %v99
    %627 = vmatpush1.msra.mxu0 %v98
    %628 = vmatprep.subr.mxu0 0.0
    %629 = vmatpush1.msra.mxu0 0.0
    %630 = vmatprep.subr.mxu0 0.0
    %631 = vmatpush1.msra.mxu0 0.0
    %632 = vmatprep.subr.mxu0 0.0
    %633 = vmatpush1.msra.mxu0 0.0
    %634 = vmatprep.subr.mxu0 0.0
    %635 = vmatpush1.msra.mxu0 0.0
    %636 = vmatprep.subr.mxu0 0.0
    %637 = vmatpush1.msra.mxu0 0.0
    %638 = vmatprep.subr.mxu0 0.0
    %639 = vmatpush1.msra.mxu0 0.0
    %640 = vmatprep.subr.mxu0 0.0
    %641 = vmatpush1.msra.mxu0 0.0
    %642 = vmatprep.subr.mxu0 0.0
    %643 = vmatpush1.msra.mxu0 0.0
    %644 = vmatprep.subr.mxu0 0.0
    %645 = vmatpush1.msra.mxu0 0.0
    %646 = vmatprep.subr.mxu0 0.0
    %647 = vmatpush1.msra.mxu0 0.0
    %648 = vmatprep.subr.mxu0 0.0
    %649 = vmatpush1.msra.mxu0 0.0
    %650 = vmatprep.subr.mxu0 0.0
    %651 = vmatpush1.msra.mxu0 0.0
    %652 = vmatprep.subr.mxu0 0.0
    %653 = vmatpush1.msra.mxu0 0.0
    %654 = vmatprep.subr.mxu0 0.0
    %655 = vmatpush1.msra.mxu0 0.0
    %656 = vmatprep.subr.mxu0 0.0
    %657 = vmatpush1.msra.mxu0 0.0
    %658 = vmatprep.subr.mxu0 0.0
    %659 = vmatpush1.msra.mxu0 0.0
    %660 = vmatprep.mubr.f32.mxu0 0.0
    %661 = vmatmul.mubr.f32.gmra.mrb[0].mxu0 %v510
    %v662 = vpop.f32.mrb[0].mxu0
    %v663 = vadd.f32 0.0, %v662
    %v664 = vpop.f32.mrb[0].mxu0
    %v665 = vadd.f32 0.0, %v664
    %666 = vdwg.mxu0
    %v667 = vadd.f32 %v521, %v592
    %v668 = vadd.f32 %v522, %v594
    %v669 = vadd.f32 %v523, %v663
    %v670 = vadd.f32 %v524, %v665
    %v671 = vxor.u32 %v667, 2147483648
    %v672 = vmul.f32 %v671, 1.442695
    %v673 = vpow.pop %v672
    %v674 = vadd.f32 %v673, 1.0
    %v675 = vrcp.pop %v674
    %v676 = vmul.f32 1.0, %v675
    %v677 = vxor.u32 %v668, 2147483648
    %v678 = vmul.f32 %v677, 1.442695
    %v679 = vpow.pop %v678
    %v680 = vadd.f32 %v679, 1.0
    %v681 = vrcp.pop %v680
    %v682 = vmul.f32 1.0, %v681
    %v683 = vtanh.pop %v669
    %v684 = vxor.u32 %v670, 2147483648
    %v685 = vmul.f32 %v684, 1.442695
    %v686 = vpow.pop %v685
    %v687 = vadd.f32 %v686, 1.0
    %v688 = vrcp.pop %v687
    %v689 = vmul.f32 1.0, %v688
    %v690 = vmul.f32 %v682, %v508
    %v691 = vmul.f32 %v676, %v683
    %v692 = vadd.f32 %v690, %v691
    %v693 = vtanh.pop %v692
    %v694 = vmul.f32 %v689, %v693
    %v695 = vld [vmem:[%s0 + $0x6] sm:$0x3]
    %697 = vset.pattern.permute.xlu0 0
    %698 = vperm.xlu0 %697, %v695
    %v699 = vpop.permute.xlu0 %698
    %v701 = vmul.f32 %v699, %v111
    %v702 = vmul.f32 %v699, %v115
    %v703 = vmul.f32 %v699, %v119
    %v704 = vmul.f32 %v699, %v123
    %v705 = vadd.f32 %v701, %v136
    %v706 = vadd.f32 %v702, %v140
    %v707 = vadd.f32 %v703, %v144
    %v708 = vadd.f32 %v704, %v148
    %709 = vmatprep.subr.mxu0 %v37
    %710 = vmatpush1.msra.mxu0 %v36
    %711 = vmatprep.subr.mxu0 %v41
    %712 = vmatpush1.msra.mxu0 %v40
    %713 = vmatprep.subr.mxu0 %v45
    %714 = vmatpush1.msra.mxu0 %v44
    %715 = vmatprep.subr.mxu0 %v49
    %716 = vmatpush1.msra.mxu0 %v48
    %717 = vmatprep.subr.mxu0 %v53
    %718 = vmatpush1.msra.mxu0 %v52
    %719 = vmatprep.subr.mxu0 %v57
    %720 = vmatpush1.msra.mxu0 %v56
    %721 = vmatprep.subr.mxu0 %v61
    %722 = vmatpush1.msra.mxu0 %v60
    %723 = vmatprep.subr.mxu0 %v65
    %724 = vmatpush1.msra.mxu0 %v64
    %725 = vmatprep.subr.mxu0 %v69
    %726 = vmatpush1.msra.mxu0 %v68
    %727 = vmatprep.subr.mxu0 %v73
    %728 = vmatpush1.msra.mxu0 %v72
    %729 = vmatprep.subr.mxu0 %v77
    %730 = vmatpush1.msra.mxu0 %v76
    %731 = vmatprep.subr.mxu0 %v81
    %732 = vmatpush1.msra.mxu0 %v80
    %733 = vmatprep.subr.mxu0 %v85
    %734 = vmatpush1.msra.mxu0 %v84
    %735 = vmatprep.subr.mxu0 %v89
    %736 = vmatpush1.msra.mxu0 %v88
    %737 = vmatprep.subr.mxu0 %v93
    %738 = vmatpush1.msra.mxu0 %v92
    %739 = vmatprep.subr.mxu0 %v97
    %740 = vmatpush1.msra.mxu0 %v96
    %741 = vmatprep.subr.mxu0 0.0
    %742 = vmatpush1.msra.mxu0 0.0
    %743 = vmatprep.subr.mxu0 0.0
    %744 = vmatpush1.msra.mxu0 0.0
    %745 = vmatprep.subr.mxu0 0.0
    %746 = vmatpush1.msra.mxu0 0.0
    %747 = vmatprep.subr.mxu0 0.0
    %748 = vmatpush1.msra.mxu0 0.0
    %749 = vmatprep.subr.mxu0 0.0
    %750 = vmatpush1.msra.mxu0 0.0
    %751 = vmatprep.subr.mxu0 0.0
    %752 = vmatpush1.msra.mxu0 0.0
    %753 = vmatprep.subr.mxu0 0.0
    %754 = vmatpush1.msra.mxu0 0.0
    %755 = vmatprep.subr.mxu0 0.0
    %756 = vmatpush1.msra.mxu0 0.0
    %757 = vmatprep.subr.mxu0 0.0
    %758 = vmatpush1.msra.mxu0 0.0
    %759 = vmatprep.subr.mxu0 0.0
    %760 = vmatpush1.msra.mxu0 0.0
    %761 = vmatprep.subr.mxu0 0.0
    %762 = vmatpush1.msra.mxu0 0.0
    %763 = vmatprep.subr.mxu0 0.0
    %764 = vmatpush1.msra.mxu0 0.0
    %765 = vmatprep.subr.mxu0 0.0
    %766 = vmatpush1.msra.mxu0 0.0
    %767 = vmatprep.subr.mxu0 0.0
    %768 = vmatpush1.msra.mxu0 0.0
    %769 = vmatprep.subr.mxu0 0.0
    %770 = vmatpush1.msra.mxu0 0.0
    %771 = vmatprep.subr.mxu0 0.0
    %772 = vmatpush1.msra.mxu0 0.0
    %773 = vmatprep.mubr.f32.mxu0 0.0
    %774 = vmatmul.mubr.f32.gmra.mrb[0].mxu0 %v694
    %v775 = vpop.f32.mrb[0].mxu0
    %v776 = vadd.f32 0.0, %v775
    %v777 = vpop.f32.mrb[0].mxu0
    %v778 = vadd.f32 0.0, %v777
    %779 = vdwg.mxu0
    %780 = vmatprep.subr.mxu0 %v39
    %781 = vmatpush1.msra.mxu0 %v38
    %782 = vmatprep.subr.mxu0 %v43
    %783 = vmatpush1.msra.mxu0 %v42
    %784 = vmatprep.subr.mxu0 %v47
    %785 = vmatpush1.msra.mxu0 %v46
    %786 = vmatprep.subr.mxu0 %v51
    %787 = vmatpush1.msra.mxu0 %v50
    %788 = vmatprep.subr.mxu0 %v55
    %789 = vmatpush1.msra.mxu0 %v54
    %790 = vmatprep.subr.mxu0 %v59
    %791 = vmatpush1.msra.mxu0 %v58
    %792 = vmatprep.subr.mxu0 %v63
    %793 = vmatpush1.msra.mxu0 %v62
    %794 = vmatprep.subr.mxu0 %v67
    %795 = vmatpush1.msra.mxu0 %v66
    %796 = vmatprep.subr.mxu0 %v71
    %797 = vmatpush1.msra.mxu0 %v70
    %798 = vmatprep.subr.mxu0 %v75
    %799 = vmatpush1.msra.mxu0 %v74
    %800 = vmatprep.subr.mxu0 %v79
    %801 = vmatpush1.msra.mxu0 %v78
    %802 = vmatprep.subr.mxu0 %v83
    %803 = vmatpush1.msra.mxu0 %v82
    %804 = vmatprep.subr.mxu0 %v87
    %805 = vmatpush1.msra.mxu0 %v86
    %806 = vmatprep.subr.mxu0 %v91
    %807 = vmatpush1.msra.mxu0 %v90
    %808 = vmatprep.subr.mxu0 %v95
    %809 = vmatpush1.msra.mxu0 %v94
    %810 = vmatprep.subr.mxu0 %v99
    %811 = vmatpush1.msra.mxu0 %v98
    %812 = vmatprep.subr.mxu0 0.0
    %813 = vmatpush1.msra.mxu0 0.0
    %814 = vmatprep.subr.mxu0 0.0
    %815 = vmatpush1.msra.mxu0 0.0
    %816 = vmatprep.subr.mxu0 0.0
    %817 = vmatpush1.msra.mxu0 0.0
    %818 = vmatprep.subr.mxu0 0.0
    %819 = vmatpush1.msra.mxu0 0.0
    %820 = vmatprep.subr.mxu0 0.0
    %821 = vmatpush1.msra.mxu0 0.0
    %822 = vmatprep.subr.mxu0 0.0
    %823 = vmatpush1.msra.mxu0 0.0
    %824 = vmatprep.subr.mxu0 0.0
    %825 = vmatpush1.msra.mxu0 0.0
    %826 = vmatprep.subr.mxu0 0.0
    %827 = vmatpush1.msra.mxu0 0.0
    %828 = vmatprep.subr.mxu0 0.0
    %829 = vmatpush1.msra.mxu0 0.0
    %830 = vmatprep.subr.mxu0 0.0
    %831 = vmatpush1.msra.mxu0 0.0
    %832 = vmatprep.subr.mxu0 0.0
    %833 = vmatpush1.msra.mxu0 0.0
    %834 = vmatprep.subr.mxu0 0.0
    %835 = vmatpush1.msra.mxu0 0.0
    %836 = vmatprep.subr.mxu0 0.0
    %837 = vmatpush1.msra.mxu0 0.0
    %838 = vmatprep.subr.mxu0 0.0
    %839 = vmatpush1.msra.mxu0 0.0
    %840 = vmatprep.subr.mxu0 0.0
    %841 = vmatpush1.msra.mxu0 0.0
    %842 = vmatprep.subr.mxu0 0.0
    %843 = vmatpush1.msra.mxu0 0.0
    %844 = vmatprep.mubr.f32.mxu0 0.0
    %845 = vmatmul.mubr.f32.gmra.mrb[0].mxu0 %v694
    %v846 = vpop.f32.mrb[0].mxu0
    %v847 = vadd.f32 0.0, %v846
    %v848 = vpop.f32.mrb[0].mxu0
    %v849 = vadd.f32 0.0, %v848
    %850 = vdwg.mxu0
    %v851 = vadd.f32 %v705, %v776
    %v852 = vadd.f32 %v706, %v778
    %v853 = vadd.f32 %v707, %v847
    %v854 = vadd.f32 %v708, %v849
    %v855 = vxor.u32 %v851, 2147483648
    %v856 = vmul.f32 %v855, 1.442695
    %v857 = vpow.pop %v856
    %v858 = vadd.f32 %v857, 1.0
    %v859 = vrcp.pop %v858
    %v860 = vmul.f32 1.0, %v859
    %v861 = vxor.u32 %v852, 2147483648
    %v862 = vmul.f32 %v861, 1.442695
    %v863 = vpow.pop %v862
    %v864 = vadd.f32 %v863, 1.0
    %v865 = vrcp.pop %v864
    %v866 = vmul.f32 1.0, %v865
    %v867 = vtanh.pop %v853
    %v868 = vxor.u32 %v854, 2147483648
    %v869 = vmul.f32 %v868, 1.442695
    %v870 = vpow.pop %v869
    %v871 = vadd.f32 %v870, 1.0
    %v872 = vrcp.pop %v871
    %v873 = vmul.f32 1.0, %v872
    %v874 = vmul.f32 %v866, %v692
    %v875 = vmul.f32 %v860, %v867
    %v876 = vadd.f32 %v874, %v875
    %v877 = vtanh.pop %v876
    %v878 = vmul.f32 %v873, %v877
    %v879 = vld [vmem:[%s0 + $0x8] sm:$0x3]
    %881 = vset.pattern.permute.xlu0 0
    %882 = vperm.xlu0 %881, %v879
    %v883 = vpop.permute.xlu0 %882
    %v885 = vmul.f32 %v883, %v111
    %v886 = vmul.f32 %v883, %v115
    %v887 = vmul.f32 %v883, %v119
    %v888 = vmul.f32 %v883, %v123
    %v889 = vadd.f32 %v885, %v136
    %v890 = vadd.f32 %v886, %v140
    %v891 = vadd.f32 %v887, %v144
    %v892 = vadd.f32 %v888, %v148
    %893 = vmatprep.subr.mxu0 %v37
    %894 = vmatpush1.msra.mxu0 %v36
    %895 = vmatprep.subr.mxu0 %v41
    %896 = vmatpush1.msra.mxu0 %v40
    %897 = vmatprep.subr.mxu0 %v45
    %898 = vmatpush1.msra.mxu0 %v44
    %899 = vmatprep.subr.mxu0 %v49
    %900 = vmatpush1.msra.mxu0 %v48
    %901 = vmatprep.subr.mxu0 %v53
    %902 = vmatpush1.msra.mxu0 %v52
    %903 = vmatprep.subr.mxu0 %v57
    %904 = vmatpush1.msra.mxu0 %v56
    %905 = vmatprep.subr.mxu0 %v61
    %906 = vmatpush1.msra.mxu0 %v60
    %907 = vmatprep.subr.mxu0 %v65
    %908 = vmatpush1.msra.mxu0 %v64
    %909 = vmatprep.subr.mxu0 %v69
    %910 = vmatpush1.msra.mxu0 %v68
    %911 = vmatprep.subr.mxu0 %v73
    %912 = vmatpush1.msra.mxu0 %v72
    %913 = vmatprep.subr.mxu0 %v77
    %914 = vmatpush1.msra.mxu0 %v76
    %915 = vmatprep.subr.mxu0 %v81
    %916 = vmatpush1.msra.mxu0 %v80
    %917 = vmatprep.subr.mxu0 %v85
    %918 = vmatpush1.msra.mxu0 %v84
    %919 = vmatprep.subr.mxu0 %v89
    %920 = vmatpush1.msra.mxu0 %v88
    %921 = vmatprep.subr.mxu0 %v93
    %922 = vmatpush1.msra.mxu0 %v92
    %923 = vmatprep.subr.mxu0 %v97
    %924 = vmatpush1.msra.mxu0 %v96
    %925 = vmatprep.subr.mxu0 0.0
    %926 = vmatpush1.msra.mxu0 0.0
    %927 = vmatprep.subr.mxu0 0.0
    %928 = vmatpush1.msra.mxu0 0.0
    %929 = vmatprep.subr.mxu0 0.0
    %930 = vmatpush1.msra.mxu0 0.0
    %931 = vmatprep.subr.mxu0 0.0
    %932 = vmatpush1.msra.mxu0 0.0
    %933 = vmatprep.subr.mxu0 0.0
    %934 = vmatpush1.msra.mxu0 0.0
    %935 = vmatprep.subr.mxu0 0.0
    %936 = vmatpush1.msra.mxu0 0.0
    %937 = vmatprep.subr.mxu0 0.0
    %938 = vmatpush1.msra.mxu0 0.0
    %939 = vmatprep.subr.mxu0 0.0
    %940 = vmatpush1.msra.mxu0 0.0
    %941 = vmatprep.subr.mxu0 0.0
    %942 = vmatpush1.msra.mxu0 0.0
    %943 = vmatprep.subr.mxu0 0.0
    %944 = vmatpush1.msra.mxu0 0.0
    %945 = vmatprep.subr.mxu0 0.0
    %946 = vmatpush1.msra.mxu0 0.0
    %947 = vmatprep.subr.mxu0 0.0
    %948 = vmatpush1.msra.mxu0 0.0
    %949 = vmatprep.subr.mxu0 0.0
    %950 = vmatpush1.msra.mxu0 0.0
    %951 = vmatprep.subr.mxu0 0.0
    %952 = vmatpush1.msra.mxu0 0.0
    %953 = vmatprep.subr.mxu0 0.0
    %954 = vmatpush1.msra.mxu0 0.0
    %955 = vmatprep.subr.mxu0 0.0
    %956 = vmatpush1.msra.mxu0 0.0
    %957 = vmatprep.mubr.f32.mxu0 0.0
    %958 = vmatmul.mubr.f32.gmra.mrb[0].mxu0 %v878
    %v959 = vpop.f32.mrb[0].mxu0
    %v960 = vadd.f32 0.0, %v959
    %v961 = vpop.f32.mrb[0].mxu0
    %v962 = vadd.f32 0.0, %v961
    %963 = vdwg.mxu0
    %964 = vmatprep.subr.mxu0 %v39
    %965 = vmatpush1.msra.mxu0 %v38
    %966 = vmatprep.subr.mxu0 %v43
    %967 = vmatpush1.msra.mxu0 %v42
    %968 = vmatprep.subr.mxu0 %v47
    %969 = vmatpush1.msra.mxu0 %v46
    %970 = vmatprep.subr.mxu0 %v51
    %971 = vmatpush1.msra.mxu0 %v50
    %972 = vmatprep.subr.mxu0 %v55
    %973 = vmatpush1.msra.mxu0 %v54
    %974 = vmatprep.subr.mxu0 %v59
    %975 = vmatpush1.msra.mxu0 %v58
    %976 = vmatprep.subr.mxu0 %v63
    %977 = vmatpush1.msra.mxu0 %v62
    %978 = vmatprep.subr.mxu0 %v67
    %979 = vmatpush1.msra.mxu0 %v66
    %980 = vmatprep.subr.mxu0 %v71
    %981 = vmatpush1.msra.mxu0 %v70
    %982 = vmatprep.subr.mxu0 %v75
    %983 = vmatpush1.msra.mxu0 %v74
    %984 = vmatprep.subr.mxu0 %v79
    %985 = vmatpush1.msra.mxu0 %v78
    %986 = vmatprep.subr.mxu0 %v83
    %987 = vmatpush1.msra.mxu0 %v82
    %988 = vmatprep.subr.mxu0 %v87
    %989 = vmatpush1.msra.mxu0 %v86
    %990 = vmatprep.subr.mxu0 %v91
    %991 = vmatpush1.msra.mxu0 %v90
    %992 = vmatprep.subr.mxu0 %v95
    %993 = vmatpush1.msra.mxu0 %v94
    %994 = vmatprep.subr.mxu0 %v99
    %995 = vmatpush1.msra.mxu0 %v98
    %996 = vmatprep.subr.mxu0 0.0
    %997 = vmatpush1.msra.mxu0 0.0
    %998 = vmatprep.subr.mxu0 0.0
    %999 = vmatpush1.msra.mxu0 0.0
    %1000 = vmatprep.subr.mxu0 0.0
    %1001 = vmatpush1.msra.mxu0 0.0
    %1002 = vmatprep.subr.mxu0 0.0
    %1003 = vmatpush1.msra.mxu0 0.0
    %1004 = vmatprep.subr.mxu0 0.0
    %1005 = vmatpush1.msra.mxu0 0.0
    %1006 = vmatprep.subr.mxu0 0.0
    %1007 = vmatpush1.msra.mxu0 0.0
    %1008 = vmatprep.subr.mxu0 0.0
    %1009 = vmatpush1.msra.mxu0 0.0
    %1010 = vmatprep.subr.mxu0 0.0
    %1011 = vmatpush1.msra.mxu0 0.0
    %1012 = vmatprep.subr.mxu0 0.0
    %1013 = vmatpush1.msra.mxu0 0.0
    %1014 = vmatprep.subr.mxu0 0.0
    %1015 = vmatpush1.msra.mxu0 0.0
    %1016 = vmatprep.subr.mxu0 0.0
    %1017 = vmatpush1.msra.mxu0 0.0
    %1018 = vmatprep.subr.mxu0 0.0
    %1019 = vmatpush1.msra.mxu0 0.0
    %1020 = vmatprep.subr.mxu0 0.0
    %1021 = vmatpush1.msra.mxu0 0.0
    %1022 = vmatprep.subr.mxu0 0.0
    %1023 = vmatpush1.msra.mxu0 0.0
    %1024 = vmatprep.subr.mxu0 0.0
    %1025 = vmatpush1.msra.mxu0 0.0
    %1026 = vmatprep.subr.mxu0 0.0
    %1027 = vmatpush1.msra.mxu0 0.0
    %1028 = vmatprep.mubr.f32.mxu0 0.0
    %1029 = vmatmul.mubr.f32.gmra.mrb[0].mxu0 %v878
    %v1030 = vpop.f32.mrb[0].mxu0
    %v1031 = vadd.f32 0.0, %v1030
    %v1032 = vpop.f32.mrb[0].mxu0
    %v1033 = vadd.f32 0.0, %v1032
    %1034 = vdwg.mxu0
    %v1035 = vadd.f32 %v889, %v960
    %v1036 = vadd.f32 %v890, %v962
    %v1037 = vadd.f32 %v891, %v1031
    %v1038 = vadd.f32 %v892, %v1033
    %v1039 = vxor.u32 %v1035, 2147483648
    %v1040 = vmul.f32 %v1039, 1.442695
    %v1041 = vpow.pop %v1040
    %v1042 = vadd.f32 %v1041, 1.0
    %v1043 = vrcp.pop %v1042
    %v1044 = vmul.f32 1.0, %v1043
    %v1045 = vxor.u32 %v1036, 2147483648
    %v1046 = vmul.f32 %v1045, 1.442695
    %v1047 = vpow.pop %v1046
    %v1048 = vadd.f32 %v1047, 1.0
    %v1049 = vrcp.pop %v1048
    %v1050 = vmul.f32 1.0, %v1049
    %v1051 = vtanh.pop %v1037
    %v1052 = vxor.u32 %v1038, 2147483648
    %v1053 = vmul.f32 %v1052, 1.442695
    %v1054 = vpow.pop %v1053
    %v1055 = vadd.f32 %v1054, 1.0
    %v1056 = vrcp.pop %v1055
    %v1057 = vmul.f32 1.0, %v1056
    %v1058 = vmul.f32 %v1050, %v876
    %v1059 = vmul.f32 %v1044, %v1051
    %v1060 = vadd.f32 %v1058, %v1059
    %v1061 = vtanh.pop %v1060
    %v1062 = vmul.f32 %v1057, %v1061
    %v1063 = vld [vmem:[%s0 + $0xa] sm:$0x3]
    %1065 = vset.pattern.permute.xlu0 0
    %1066 = vperm.xlu0 %1065, %v1063
    %v1067 = vpop.permute.xlu0 %1066
    %v1069 = vmul.f32 %v1067, %v111
    %v1070 = vmul.f32 %v1067, %v115
    %v1071 = vmul.f32 %v1067, %v119
    %v1072 = vmul.f32 %v1067, %v123
    %v1073 = vadd.f32 %v1069, %v136
    %v1074 = vadd.f32 %v1070, %v140
    %v1075 = vadd.f32 %v1071, %v144
    %v1076 = vadd.f32 %v1072, %v148
    %1077 = vmatprep.subr.mxu0 %v37
    %1078 = vmatpush1.msra.mxu0 %v36
    %1079 = vmatprep.subr.mxu0 %v41
    %1080 = vmatpush1.msra.mxu0 %v40
    %1081 = vmatprep.subr.mxu0 %v45
    %1082 = vmatpush1.msra.mxu0 %v44
    %1083 = vmatprep.subr.mxu0 %v49
    %1084 = vmatpush1.msra.mxu0 %v48
    %1085 = vmatprep.subr.mxu0 %v53
    %1086 = vmatpush1.msra.mxu0 %v52
    %1087 = vmatprep.subr.mxu0 %v57
    %1088 = vmatpush1.msra.mxu0 %v56
    %1089 = vmatprep.subr.mxu0 %v61
    %1090 = vmatpush1.msra.mxu0 %v60
    %1091 = vmatprep.subr.mxu0 %v65
    %1092 = vmatpush1.msra.mxu0 %v64
    %1093 = vmatprep.subr.mxu0 %v69
    %1094 = vmatpush1.msra.mxu0 %v68
    %1095 = vmatprep.subr.mxu0 %v73
    %1096 = vmatpush1.msra.mxu0 %v72
    %1097 = vmatprep.subr.mxu0 %v77
    %1098 = vmatpush1.msra.mxu0 %v76
    %1099 = vmatprep.subr.mxu0 %v81
    %1100 = vmatpush1.msra.mxu0 %v80
    %1101 = vmatprep.subr.mxu0 %v85
    %1102 = vmatpush1.msra.mxu0 %v84
    %1103 = vmatprep.subr.mxu0 %v89
    %1104 = vmatpush1.msra.mxu0 %v88
    %1105 = vmatprep.subr.mxu0 %v93
    %1106 = vmatpush1.msra.mxu0 %v92
    %1107 = vmatprep.subr.mxu0 %v97
    %1108 = vmatpush1.msra.mxu0 %v96
    %1109 = vmatprep.subr.mxu0 0.0
    %1110 = vmatpush1.msra.mxu0 0.0
    %1111 = vmatprep.subr.mxu0 0.0
    %1112 = vmatpush1.msra.mxu0 0.0
    %1113 = vmatprep.subr.mxu0 0.0
    %1114 = vmatpush1.msra.mxu0 0.0
    %1115 = vmatprep.subr.mxu0 0.0
    %1116 = vmatpush1.msra.mxu0 0.0
    %1117 = vmatprep.subr.mxu0 0.0
    %1118 = vmatpush1.msra.mxu0 0.0
    %1119 = vmatprep.subr.mxu0 0.0
    %1120 = vmatpush1.msra.mxu0 0.0
    %1121 = vmatprep.subr.mxu0 0.0
    %1122 = vmatpush1.msra.mxu0 0.0
    %1123 = vmatprep.subr.mxu0 0.0
    %1124 = vmatpush1.msra.mxu0 0.0
    %1125 = vmatprep.subr.mxu0 0.0
    %1126 = vmatpush1.msra.mxu0 0.0
    %1127 = vmatprep.subr.mxu0 0.0
    %1128 = vmatpush1.msra.mxu0 0.0
    %1129 = vmatprep.subr.mxu0 0.0
    %1130 = vmatpush1.msra.mxu0 0.0
    %1131 = vmatprep.subr.mxu0 0.0
    %1132 = vmatpush1.msra.mxu0 0.0
    %1133 = vmatprep.subr.mxu0 0.0
    %1134 = vmatpush1.msra.mxu0 0.0
    %1135 = vmatprep.subr.mxu0 0.0
    %1136 = vmatpush1.msra.mxu0 0.0
    %1137 = vmatprep.subr.mxu0 0.0
    %1138 = vmatpush1.msra.mxu0 0.0
    %1139 = vmatprep.subr.mxu0 0.0
    %1140 = vmatpush1.msra.mxu0 0.0
    %1141 = vmatprep.mubr.f32.mxu0 0.0
    %1142 = vmatmul.mubr.f32.gmra.mrb[0].mxu0 %v1062
    %v1143 = vpop.f32.mrb[0].mxu0
    %v1144 = vadd.f32 0.0, %v1143
    %v1145 = vpop.f32.mrb[0].mxu0
    %v1146 = vadd.f32 0.0, %v1145
    %1147 = vdwg.mxu0
    %1148 = vmatprep.subr.mxu0 %v39
    %1149 = vmatpush1.msra.mxu0 %v38
    %1150 = vmatprep.subr.mxu0 %v43
    %1151 = vmatpush1.msra.mxu0 %v42
    %1152 = vmatprep.subr.mxu0 %v47
    %1153 = vmatpush1.msra.mxu0 %v46
    %1154 = vmatprep.subr.mxu0 %v51
    %1155 = vmatpush1.msra.mxu0 %v50
    %1156 = vmatprep.subr.mxu0 %v55
    %1157 = vmatpush1.msra.mxu0 %v54
    %1158 = vmatprep.subr.mxu0 %v59
    %1159 = vmatpush1.msra.mxu0 %v58
    %1160 = vmatprep.subr.mxu0 %v63
    %1161 = vmatpush1.msra.mxu0 %v62
    %1162 = vmatprep.subr.mxu0 %v67
    %1163 = vmatpush1.msra.mxu0 %v66
    %1164 = vmatprep.subr.mxu0 %v71
    %1165 = vmatpush1.msra.mxu0 %v70
    %1166 = vmatprep.subr.mxu0 %v75
    %1167 = vmatpush1.msra.mxu0 %v74
    %1168 = vmatprep.subr.mxu0 %v79
    %1169 = vmatpush1.msra.mxu0 %v78
    %1170 = vmatprep.subr.mxu0 %v83
    %1171 = vmatpush1.msra.mxu0 %v82
    %1172 = vmatprep.subr.mxu0 %v87
    %1173 = vmatpush1.msra.mxu0 %v86
    %1174 = vmatprep.subr.mxu0 %v91
    %1175 = vmatpush1.msra.mxu0 %v90
    %1176 = vmatprep.subr.mxu0 %v95
    %1177 = vmatpush1.msra.mxu0 %v94
    %1178 = vmatprep.subr.mxu0 %v99
    %1179 = vmatpush1.msra.mxu0 %v98
    %1180 = vmatprep.subr.mxu0 0.0
    %1181 = vmatpush1.msra.mxu0 0.0
    %1182 = vmatprep.subr.mxu0 0.0
    %1183 = vmatpush1.msra.mxu0 0.0
    %1184 = vmatprep.subr.mxu0 0.0
    %1185 = vmatpush1.msra.mxu0 0.0
    %1186 = vmatprep.subr.mxu0 0.0
    %1187 = vmatpush1.msra.mxu0 0.0
    %1188 = vmatprep.subr.mxu0 0.0
    %1189 = vmatpush1.msra.mxu0 0.0
    %1190 = vmatprep.subr.mxu0 0.0
    %1191 = vmatpush1.msra.mxu0 0.0
    %1192 = vmatprep.subr.mxu0 0.0
    %1193 = vmatpush1.msra.mxu0 0.0
    %1194 = vmatprep.subr.mxu0 0.0
    %1195 = vmatpush1.msra.mxu0 0.0
    %1196 = vmatprep.subr.mxu0 0.0
    %1197 = vmatpush1.msra.mxu0 0.0
    %1198 = vmatprep.subr.mxu0 0.0
    %1199 = vmatpush1.msra.mxu0 0.0
    %1200 = vmatprep.subr.mxu0 0.0
    %1201 = vmatpush1.msra.mxu0 0.0
    %1202 = vmatprep.subr.mxu0 0.0
    %1203 = vmatpush1.msra.mxu0 0.0
    %1204 = vmatprep.subr.mxu0 0.0
    %1205 = vmatpush1.msra.mxu0 0.0
    %1206 = vmatprep.subr.mxu0 0.0
    %1207 = vmatpush1.msra.mxu0 0.0
    %1208 = vmatprep.subr.mxu0 0.0
    %1209 = vmatpush1.msra.mxu0 0.0
    %1210 = vmatprep.subr.mxu0 0.0
    %1211 = vmatpush1.msra.mxu0 0.0
    %1212 = vmatprep.mubr.f32.mxu0 0.0
    %1213 = vmatmul.mubr.f32.gmra.mrb[0].mxu0 %v1062
    %v1214 = vpop.f32.mrb[0].mxu0
    %v1215 = vadd.f32 0.0, %v1214
    %v1216 = vpop.f32.mrb[0].mxu0
    %v1217 = vadd.f32 0.0, %v1216
    %1218 = vdwg.mxu0
    %v1219 = vadd.f32 %v1073, %v1144
    %v1220 = vadd.f32 %v1074, %v1146
    %v1221 = vadd.f32 %v1075, %v1215
    %v1222 = vadd.f32 %v1076, %v1217
    %v1223 = vxor.u32 %v1219, 2147483648
    %v1224 = vmul.f32 %v1223, 1.442695
    %v1225 = vpow.pop %v1224
    %v1226 = vadd.f32 %v1225, 1.0
    %v1227 = vrcp.pop %v1226
    %v1228 = vmul.f32 1.0, %v1227
    %v1229 = vxor.u32 %v1220, 2147483648
    %v1230 = vmul.f32 %v1229, 1.442695
    %v1231 = vpow.pop %v1230
    %v1232 = vadd.f32 %v1231, 1.0
    %v1233 = vrcp.pop %v1232
    %v1234 = vmul.f32 1.0, %v1233
    %v1235 = vtanh.pop %v1221
    %v1236 = vxor.u32 %v1222, 2147483648
    %v1237 = vmul.f32 %v1236, 1.442695
    %v1238 = vpow.pop %v1237
    %v1239 = vadd.f32 %v1238, 1.0
    %v1240 = vrcp.pop %v1239
    %v1241 = vmul.f32 1.0, %v1240
    %v1242 = vmul.f32 %v1234, %v1060
    %v1243 = vmul.f32 %v1228, %v1235
    %v1244 = vadd.f32 %v1242, %v1243
    %v1245 = vtanh.pop %v1244
    %v1246 = vmul.f32 %v1241, %v1245
    %v1247 = vld [vmem:[%s0 + $0xc] sm:$0x3]
    %1249 = vset.pattern.permute.xlu0 0
    %1250 = vperm.xlu0 %1249, %v1247
    %v1251 = vpop.permute.xlu0 %1250
    %v1253 = vmul.f32 %v1251, %v111
    %v1254 = vmul.f32 %v1251, %v115
    %v1255 = vmul.f32 %v1251, %v119
    %v1256 = vmul.f32 %v1251, %v123
    %v1257 = vadd.f32 %v1253, %v136
    %v1258 = vadd.f32 %v1254, %v140
    %v1259 = vadd.f32 %v1255, %v144
    %v1260 = vadd.f32 %v1256, %v148
    %1261 = vmatprep.subr.mxu0 %v37
    %1262 = vmatpush1.msra.mxu0 %v36
    %1263 = vmatprep.subr.mxu0 %v41
    %1264 = vmatpush1.msra.mxu0 %v40
    %1265 = vmatprep.subr.mxu0 %v45
    %1266 = vmatpush1.msra.mxu0 %v44
    %1267 = vmatprep.subr.mxu0 %v49
    %1268 = vmatpush1.msra.mxu0 %v48
    %1269 = vmatprep.subr.mxu0 %v53
    %1270 = vmatpush1.msra.mxu0 %v52
    %1271 = vmatprep.subr.mxu0 %v57
    %1272 = vmatpush1.msra.mxu0 %v56
    %1273 = vmatprep.subr.mxu0 %v61
    %1274 = vmatpush1.msra.mxu0 %v60
    %1275 = vmatprep.subr.mxu0 %v65
    %1276 = vmatpush1.msra.mxu0 %v64
    %1277 = vmatprep.subr.mxu0 %v69
    %1278 = vmatpush1.msra.mxu0 %v68
    %1279 = vmatprep.subr.mxu0 %v73
    %1280 = vmatpush1.msra.mxu0 %v72
    %1281 = vmatprep.subr.mxu0 %v77
    %1282 = vmatpush1.msra.mxu0 %v76
    %1283 = vmatprep.subr.mxu0 %v81
    %1284 = vmatpush1.msra.mxu0 %v80
    %1285 = vmatprep.subr.mxu0 %v85
    %1286 = vmatpush1.msra.mxu0 %v84
    %1287 = vmatprep.subr.mxu0 %v89
    %1288 = vmatpush1.msra.mxu0 %v88
    %1289 = vmatprep.subr.mxu0 %v93
    %1290 = vmatpush1.msra.mxu0 %v92
    %1291 = vmatprep.subr.mxu0 %v97
    %1292 = vmatpush1.msra.mxu0 %v96
    %1293 = vmatprep.subr.mxu0 0.0
    %1294 = vmatpush1.msra.mxu0 0.0
    %1295 = vmatprep.subr.mxu0 0.0
    %1296 = vmatpush1.msra.mxu0 0.0
    %1297 = vmatprep.subr.mxu0 0.0
    %1298 = vmatpush1.msra.mxu0 0.0
    %1299 = vmatprep.subr.mxu0 0.0
    %1300 = vmatpush1.msra.mxu0 0.0
    %1301 = vmatprep.subr.mxu0 0.0
    %1302 = vmatpush1.msra.mxu0 0.0
    %1303 = vmatprep.subr.mxu0 0.0
    %1304 = vmatpush1.msra.mxu0 0.0
    %1305 = vmatprep.subr.mxu0 0.0
    %1306 = vmatpush1.msra.mxu0 0.0
    %1307 = vmatprep.subr.mxu0 0.0
    %1308 = vmatpush1.msra.mxu0 0.0
    %1309 = vmatprep.subr.mxu0 0.0
    %1310 = vmatpush1.msra.mxu0 0.0
    %1311 = vmatprep.subr.mxu0 0.0
    %1312 = vmatpush1.msra.mxu0 0.0
    %1313 = vmatprep.subr.mxu0 0.0
    %1314 = vmatpush1.msra.mxu0 0.0
    %1315 = vmatprep.subr.mxu0 0.0
    %1316 = vmatpush1.msra.mxu0 0.0
    %1317 = vmatprep.subr.mxu0 0.0
    %1318 = vmatpush1.msra.mxu0 0.0
    %1319 = vmatprep.subr.mxu0 0.0
    %1320 = vmatpush1.msra.mxu0 0.0
    %1321 = vmatprep.subr.mxu0 0.0
    %1322 = vmatpush1.msra.mxu0 0.0
    %1323 = vmatprep.subr.mxu0 0.0
    %1324 = vmatpush1.msra.mxu0 0.0
    %1325 = vmatprep.mubr.f32.mxu0 0.0
    %1326 = vmatmul.mubr.f32.gmra.mrb[0].mxu0 %v1246
    %v1327 = vpop.f32.mrb[0].mxu0
    %v1328 = vadd.f32 0.0, %v1327
    %v1329 = vpop.f32.mrb[0].mxu0
    %v1330 = vadd.f32 0.0, %v1329
    %1331 = vdwg.mxu0
    %1332 = vmatprep.subr.mxu0 %v39
    %1333 = vmatpush1.msra.mxu0 %v38
    %1334 = vmatprep.subr.mxu0 %v43
    %1335 = vmatpush1.msra.mxu0 %v42
    %1336 = vmatprep.subr.mxu0 %v47
    %1337 = vmatpush1.msra.mxu0 %v46
    %1338 = vmatprep.subr.mxu0 %v51
    %1339 = vmatpush1.msra.mxu0 %v50
    %1340 = vmatprep.subr.mxu0 %v55
    %1341 = vmatpush1.msra.mxu0 %v54
    %1342 = vmatprep.subr.mxu0 %v59
    %1343 = vmatpush1.msra.mxu0 %v58
    %1344 = vmatprep.subr.mxu0 %v63
    %1345 = vmatpush1.msra.mxu0 %v62
    %1346 = vmatprep.subr.mxu0 %v67
    %1347 = vmatpush1.msra.mxu0 %v66
    %1348 = vmatprep.subr.mxu0 %v71
    %1349 = vmatpush1.msra.mxu0 %v70
    %1350 = vmatprep.subr.mxu0 %v75
    %1351 = vmatpush1.msra.mxu0 %v74
    %1352 = vmatprep.subr.mxu0 %v79
    %1353 = vmatpush1.msra.mxu0 %v78
    %1354 = vmatprep.subr.mxu0 %v83
    %1355 = vmatpush1.msra.mxu0 %v82
    %1356 = vmatprep.subr.mxu0 %v87
    %1357 = vmatpush1.msra.mxu0 %v86
    %1358 = vmatprep.subr.mxu0 %v91
    %1359 = vmatpush1.msra.mxu0 %v90
    %1360 = vmatprep.subr.mxu0 %v95
    %1361 = vmatpush1.msra.mxu0 %v94
    %1362 = vmatprep.subr.mxu0 %v99
    %1363 = vmatpush1.msra.mxu0 %v98
    %1364 = vmatprep.subr.mxu0 0.0
    %1365 = vmatpush1.msra.mxu0 0.0
    %1366 = vmatprep.subr.mxu0 0.0
    %1367 = vmatpush1.msra.mxu0 0.0
    %1368 = vmatprep.subr.mxu0 0.0
    %1369 = vmatpush1.msra.mxu0 0.0
    %1370 = vmatprep.subr.mxu0 0.0
    %1371 = vmatpush1.msra.mxu0 0.0
    %1372 = vmatprep.subr.mxu0 0.0
    %1373 = vmatpush1.msra.mxu0 0.0
    %1374 = vmatprep.subr.mxu0 0.0
    %1375 = vmatpush1.msra.mxu0 0.0
    %1376 = vmatprep.subr.mxu0 0.0
    %1377 = vmatpush1.msra.mxu0 0.0
    %1378 = vmatprep.subr.mxu0 0.0
    %1379 = vmatpush1.msra.mxu0 0.0
    %1380 = vmatprep.subr.mxu0 0.0
    %1381 = vmatpush1.msra.mxu0 0.0
    %1382 = vmatprep.subr.mxu0 0.0
    %1383 = vmatpush1.msra.mxu0 0.0
    %1384 = vmatprep.subr.mxu0 0.0
    %1385 = vmatpush1.msra.mxu0 0.0
    %1386 = vmatprep.subr.mxu0 0.0
    %1387 = vmatpush1.msra.mxu0 0.0
    %1388 = vmatprep.subr.mxu0 0.0
    %1389 = vmatpush1.msra.mxu0 0.0
    %1390 = vmatprep.subr.mxu0 0.0
    %1391 = vmatpush1.msra.mxu0 0.0
    %1392 = vmatprep.subr.mxu0 0.0
    %1393 = vmatpush1.msra.mxu0 0.0
    %1394 = vmatprep.subr.mxu0 0.0
    %1395 = vmatpush1.msra.mxu0 0.0
    %1396 = vmatprep.mubr.f32.mxu0 0.0
    %1397 = vmatmul.mubr.f32.gmra.mrb[0].mxu0 %v1246
    %v1398 = vpop.f32.mrb[0].mxu0
    %v1399 = vadd.f32 0.0, %v1398
    %v1400 = vpop.f32.mrb[0].mxu0
    %v1401 = vadd.f32 0.0, %v1400
    %1402 = vdwg.mxu0
    %v1403 = vadd.f32 %v1257, %v1328
    %v1404 = vadd.f32 %v1258, %v1330
    %v1405 = vadd.f32 %v1259, %v1399
    %v1406 = vadd.f32 %v1260, %v1401
    %v1407 = vxor.u32 %v1403, 2147483648
    %v1408 = vmul.f32 %v1407, 1.442695
    %v1409 = vpow.pop %v1408
    %v1410 = vadd.f32 %v1409, 1.0
    %v1411 = vrcp.pop %v1410
    %v1412 = vmul.f32 1.0, %v1411
    %v1413 = vxor.u32 %v1404, 2147483648
    %v1414 = vmul.f32 %v1413, 1.442695
    %v1415 = vpow.pop %v1414
    %v1416 = vadd.f32 %v1415, 1.0
    %v1417 = vrcp.pop %v1416
    %v1418 = vmul.f32 1.0, %v1417
    %v1419 = vtanh.pop %v1405
    %v1420 = vxor.u32 %v1406, 2147483648
    %v1421 = vmul.f32 %v1420, 1.442695
    %v1422 = vpow.pop %v1421
    %v1423 = vadd.f32 %v1422, 1.0
    %v1424 = vrcp.pop %v1423
    %v1425 = vmul.f32 1.0, %v1424
    %v1426 = vmul.f32 %v1418, %v1244
    %v1427 = vmul.f32 %v1412, %v1419
    %v1428 = vadd.f32 %v1426, %v1427
    %v1429 = vtanh.pop %v1428
    %v1430 = vmul.f32 %v1425, %v1429
    %v1431 = vld [vmem:[%s0 + $0xe] sm:$0x3]
    %1433 = vset.pattern.permute.xlu0 0
    %1434 = vperm.xlu0 %1433, %v1431
    %v1435 = vpop.permute.xlu0 %1434
    %v1437 = vmul.f32 %v1435, %v111
    %v1438 = vmul.f32 %v1435, %v115
    %v1439 = vmul.f32 %v1435, %v119
    %v1440 = vmul.f32 %v1435, %v123
    %v1441 = vadd.f32 %v1437, %v136
    %v1442 = vadd.f32 %v1438, %v140
    %v1443 = vadd.f32 %v1439, %v144
    %v1444 = vadd.f32 %v1440, %v148
    %1445 = vmatprep.subr.mxu0 %v37
    %1446 = vmatpush1.msra.mxu0 %v36
    %1447 = vmatprep.subr.mxu0 %v41
    %1448 = vmatpush1.msra.mxu0 %v40
    %1449 = vmatprep.subr.mxu0 %v45
    %1450 = vmatpush1.msra.mxu0 %v44
    %1451 = vmatprep.subr.mxu0 %v49
    %1452 = vmatpush1.msra.mxu0 %v48
    %1453 = vmatprep.subr.mxu0 %v53
    %1454 = vmatpush1.msra.mxu0 %v52
    %1455 = vmatprep.subr.mxu0 %v57
    %1456 = vmatpush1.msra.mxu0 %v56
    %1457 = vmatprep.subr.mxu0 %v61
    %1458 = vmatpush1.msra.mxu0 %v60
    %1459 = vmatprep.subr.mxu0 %v65
    %1460 = vmatpush1.msra.mxu0 %v64
    %1461 = vmatprep.subr.mxu0 %v69
    %1462 = vmatpush1.msra.mxu0 %v68
    %1463 = vmatprep.subr.mxu0 %v73
    %1464 = vmatpush1.msra.mxu0 %v72
    %1465 = vmatprep.subr.mxu0 %v77
    %1466 = vmatpush1.msra.mxu0 %v76
    %1467 = vmatprep.subr.mxu0 %v81
    %1468 = vmatpush1.msra.mxu0 %v80
    %1469 = vmatprep.subr.mxu0 %v85
    %1470 = vmatpush1.msra.mxu0 %v84
    %1471 = vmatprep.subr.mxu0 %v89
    %1472 = vmatpush1.msra.mxu0 %v88
    %1473 = vmatprep.subr.mxu0 %v93
    %1474 = vmatpush1.msra.mxu0 %v92
    %1475 = vmatprep.subr.mxu0 %v97
    %1476 = vmatpush1.msra.mxu0 %v96
    %1477 = vmatprep.subr.mxu0 0.0
    %1478 = vmatpush1.msra.mxu0 0.0
    %1479 = vmatprep.subr.mxu0 0.0
    %1480 = vmatpush1.msra.mxu0 0.0
    %1481 = vmatprep.subr.mxu0 0.0
    %1482 = vmatpush1.msra.mxu0 0.0
    %1483 = vmatprep.subr.mxu0 0.0
    %1484 = vmatpush1.msra.mxu0 0.0
    %1485 = vmatprep.subr.mxu0 0.0
    %1486 = vmatpush1.msra.mxu0 0.0
    %1487 = vmatprep.subr.mxu0 0.0
    %1488 = vmatpush1.msra.mxu0 0.0
    %1489 = vmatprep.subr.mxu0 0.0
    %1490 = vmatpush1.msra.mxu0 0.0
    %1491 = vmatprep.subr.mxu0 0.0
    %1492 = vmatpush1.msra.mxu0 0.0
    %1493 = vmatprep.subr.mxu0 0.0
    %1494 = vmatpush1.msra.mxu0 0.0
    %1495 = vmatprep.subr.mxu0 0.0
    %1496 = vmatpush1.msra.mxu0 0.0
    %1497 = vmatprep.subr.mxu0 0.0
    %1498 = vmatpush1.msra.mxu0 0.0
    %1499 = vmatprep.subr.mxu0 0.0
    %1500 = vmatpush1.msra.mxu0 0.0
    %1501 = vmatprep.subr.mxu0 0.0
    %1502 = vmatpush1.msra.mxu0 0.0
    %1503 = vmatprep.subr.mxu0 0.0
    %1504 = vmatpush1.msra.mxu0 0.0
    %1505 = vmatprep.subr.mxu0 0.0
    %1506 = vmatpush1.msra.mxu0 0.0
    %1507 = vmatprep.subr.mxu0 0.0
    %1508 = vmatpush1.msra.mxu0 0.0
    %1509 = vmatprep.mubr.f32.mxu0 0.0
    %1510 = vmatmul.mubr.f32.gmra.mrb[0].mxu0 %v1430
    %v1511 = vpop.f32.mrb[0].mxu0
    %v1512 = vadd.f32 0.0, %v1511
    %v1513 = vpop.f32.mrb[0].mxu0
    %v1514 = vadd.f32 0.0, %v1513
    %1515 = vdwg.mxu0
    %1516 = vmatprep.subr.mxu0 %v39
    %1517 = vmatpush1.msra.mxu0 %v38
    %1518 = vmatprep.subr.mxu0 %v43
    %1519 = vmatpush1.msra.mxu0 %v42
    %1520 = vmatprep.subr.mxu0 %v47
    %1521 = vmatpush1.msra.mxu0 %v46
    %1522 = vmatprep.subr.mxu0 %v51
    %1523 = vmatpush1.msra.mxu0 %v50
    %1524 = vmatprep.subr.mxu0 %v55
    %1525 = vmatpush1.msra.mxu0 %v54
    %1526 = vmatprep.subr.mxu0 %v59
    %1527 = vmatpush1.msra.mxu0 %v58
    %1528 = vmatprep.subr.mxu0 %v63
    %1529 = vmatpush1.msra.mxu0 %v62
    %1530 = vmatprep.subr.mxu0 %v67
    %1531 = vmatpush1.msra.mxu0 %v66
    %1532 = vmatprep.subr.mxu0 %v71
    %1533 = vmatpush1.msra.mxu0 %v70
    %1534 = vmatprep.subr.mxu0 %v75
    %1535 = vmatpush1.msra.mxu0 %v74
    %1536 = vmatprep.subr.mxu0 %v79
    %1537 = vmatpush1.msra.mxu0 %v78
    %1538 = vmatprep.subr.mxu0 %v83
    %1539 = vmatpush1.msra.mxu0 %v82
    %1540 = vmatprep.subr.mxu0 %v87
    %1541 = vmatpush1.msra.mxu0 %v86
    %1542 = vmatprep.subr.mxu0 %v91
    %1543 = vmatpush1.msra.mxu0 %v90
    %1544 = vmatprep.subr.mxu0 %v95
    %1545 = vmatpush1.msra.mxu0 %v94
    %1546 = vmatprep.subr.mxu0 %v99
    %1547 = vmatpush1.msra.mxu0 %v98
    %1548 = vmatprep.subr.mxu0 0.0
    %1549 = vmatpush1.msra.mxu0 0.0
    %1550 = vmatprep.subr.mxu0 0.0
    %1551 = vmatpush1.msra.mxu0 0.0
    %1552 = vmatprep.subr.mxu0 0.0
    %1553 = vmatpush1.msra.mxu0 0.0
    %1554 = vmatprep.subr.mxu0 0.0
    %1555 = vmatpush1.msra.mxu0 0.0
    %1556 = vmatprep.subr.mxu0 0.0
    %1557 = vmatpush1.msra.mxu0 0.0
    %1558 = vmatprep.subr.mxu0 0.0
    %1559 = vmatpush1.msra.mxu0 0.0
    %1560 = vmatprep.subr.mxu0 0.0
    %1561 = vmatpush1.msra.mxu0 0.0
    %1562 = vmatprep.subr.mxu0 0.0
    %1563 = vmatpush1.msra.mxu0 0.0
    %1564 = vmatprep.subr.mxu0 0.0
    %1565 = vmatpush1.msra.mxu0 0.0
    %1566 = vmatprep.subr.mxu0 0.0
    %1567 = vmatpush1.msra.mxu0 0.0
    %1568 = vmatprep.subr.mxu0 0.0
    %1569 = vmatpush1.msra.mxu0 0.0
    %1570 = vmatprep.subr.mxu0 0.0
    %1571 = vmatpush1.msra.mxu0 0.0
    %1572 = vmatprep.subr.mxu0 0.0
    %1573 = vmatpush1.msra.mxu0 0.0
    %1574 = vmatprep.subr.mxu0 0.0
    %1575 = vmatpush1.msra.mxu0 0.0
    %1576 = vmatprep.subr.mxu0 0.0
    %1577 = vmatpush1.msra.mxu0 0.0
    %1578 = vmatprep.subr.mxu0 0.0
    %1579 = vmatpush1.msra.mxu0 0.0
    %1580 = vmatprep.mubr.f32.mxu0 0.0
    %1581 = vmatmul.mubr.f32.gmra.mrb[0].mxu0 %v1430
    %v1582 = vpop.f32.mrb[0].mxu0
    %v1583 = vadd.f32 0.0, %v1582
    %v1584 = vpop.f32.mrb[0].mxu0
    %v1585 = vadd.f32 0.0, %v1584
    %1586 = vdwg.mxu0
    %v1587 = vadd.f32 %v1441, %v1512
    %v1588 = vadd.f32 %v1442, %v1514
    %v1589 = vadd.f32 %v1443, %v1583
    %v1590 = vadd.f32 %v1444, %v1585
    %v1591 = vxor.u32 %v1587, 2147483648
    %v1592 = vmul.f32 %v1591, 1.442695
    %v1593 = vpow.pop %v1592
    %v1594 = vadd.f32 %v1593, 1.0
    %v1595 = vrcp.pop %v1594
    %v1596 = vmul.f32 1.0, %v1595
    %v1597 = vxor.u32 %v1588, 2147483648
    %v1598 = vmul.f32 %v1597, 1.442695
    %v1599 = vpow.pop %v1598
    %v1600 = vadd.f32 %v1599, 1.0
    %v1601 = vrcp.pop %v1600
    %v1602 = vmul.f32 1.0, %v1601
    %v1603 = vtanh.pop %v1589
    %v1604 = vxor.u32 %v1590, 2147483648
    %v1605 = vmul.f32 %v1604, 1.442695
    %v1606 = vpow.pop %v1605
    %v1607 = vadd.f32 %v1606, 1.0
    %v1608 = vrcp.pop %v1607
    %v1609 = vmul.f32 1.0, %v1608
    %v1610 = vmul.f32 %v1602, %v1428
    %v1611 = vmul.f32 %v1596, %v1603
    %v1612 = vadd.f32 %v1610, %v1611
    %v1613 = vtanh.pop %v1612
    %v1614 = vmul.f32 %v1609, %v1613
    %1615 = vst [vmem:[#allocation5] sm:$0x3] %v1614
    %1616 = vst [vmem:[#allocation6] sm:$0x3] %v1612
    // Predicated region
    $region22: #{encoder_forward.1} parent=1 // pred_check
      _
    $region23: #{encoder_forward.1} parent=1 // pred_check_branch
      %1618 = sbr.rel (0) target = $region25
    $region24: #{encoder_forward.1} parent=1 // pred_region
      %s1620 = ssub.s32 32, 32
      %1621 = vsyncadd [#allocation4], %s1620
      %s1623 = sshll.u32 [#allocation5], 4
      %s1624 = int_to_ptr.vmem [resolvable:$true] %s1623
      %1626 = dma.vmem_to_hbm [thread:$0]  %s1624, 32, %s4, [#allocation4]
    $region25: #{encoder_forward.1} parent=1 // pred_fallthru
      _
    // Predicated region
    $region26: #{encoder_forward.1} parent=1 // pred_check
      _
    $region27: #{encoder_forward.1} parent=1 // pred_check_branch
      %1628 = sbr.rel (0) target = $region29
    $region28: #{encoder_forward.1} parent=1 // pred_region
      %s1630 = ssub.s32 32, 32
      %1631 = vsyncadd [#allocation7], %s1630
      %s1633 = sshll.u32 [#allocation6], 4
      %s1634 = int_to_ptr.vmem [resolvable:$true] %s1633
      %1636 = dma.vmem_to_hbm [thread:$0]  %s1634, 32, %s5, [#allocation7]
    $region29: #{encoder_forward.1} parent=1 // pred_fallthru
      _
    // Predicated region
    $region30: #{encoder_forward.1} parent=1 // pred_check
      _
    $region31: #{encoder_forward.1} parent=1 // pred_check_branch
      %1638 = sbr.rel (0) target = $region33
    $region32: #{encoder_forward.1} parent=1 // pred_region
      %1639 = dma.done [#allocation4], 32
    $region33: #{encoder_forward.1} parent=1 // pred_fallthru
      _
    // Predicated region
    $region34: #{encoder_forward.1} parent=1 // pred_check
      _
    $region35: #{encoder_forward.1} parent=1 // pred_check_branch
      %1641 = sbr.rel (0) target = $region37
    $region36: #{encoder_forward.1} parent=1 // pred_region
      %1642 = dma.done [#allocation7], 32
    $region37: #{encoder_forward.1} parent=1 // pred_fallthru
      _
    %1643 = vsyncpa [#allocation3], 1
    %1644 = vsyncpa [#allocation4], 1
    %1645 = vsyncpa [#allocation7], 1

</llo_original>
